<compile_context>
chip_gen: v5e
topology: v5e:2x2
jax: 0.10.0
libtpu: 0.0.40
codegen_flags: <defaults>
</compile_context>

<pallas_src>
import functools

import jax
import jax.numpy as jnp
import numpy as np
from jax import lax
from jax.experimental import pallas as pl
from jax.experimental.pallas import tpu as pltpu


def _round_up(x, m):
    return ((x + m - 1) // m) * m


def _spatial_attention_kernel(w_ref, mask_ref, x_ref, o_ref, pooled_ref, *,
                              W, K, map_off, c_chunk):
    # w_ref:      (2*K*K,) f32 SMEM. Taps in (channel, kh, kw) order; channel 0
    #             (avg branch) is pre-scaled by 1/C, so the kernel accumulates
    #             a channel SUM, not a mean.
    # mask_ref:   (K, H*W) f32 VMEM. mask_ref[kw, o] == 1 iff column
    #             (o mod W) + kw - P is a valid (in-range) input column.
    # x_ref:      (bb, C, H*W) VMEM input block (flat spatial = lane axis).
    # o_ref:      (1, bb, H*W) VMEM output block (lane-dense store).
    # pooled_ref: (2, bb, FLAT) f32 VMEM scratch. Each image's flat pooled map
    #             sits at lane offset map_off; the zero guard lanes around it
    #             act as the conv's zero padding for out-of-range rows.
    bb, C, HW = x_ref.shape
    P = K // 2
    n_chunks = C // c_chunk

    # Guard lanes double as the conv's zero padding -> zero the scratch first
    # (done every step so it is also correct under megacore grid sharding).
    pooled_ref[...] = jnp.zeros_like(pooled_ref)

    # ---------- Phase 1: fused channel sum + max pooling (per image) --------
    @pl.loop(0, bb)
    def _(i):
        def c_body(ci, carry):
            s, m = carry
            start = pl.multiple_of(ci * c_chunk, c_chunk)
            v = x_ref[i, pl.ds(start, c_chunk), :].astype(jnp.float32)
            return s + v, jnp.maximum(m, v)

        init = (jnp.zeros((c_chunk, HW), jnp.float32),
                jnp.full((c_chunk, HW), -jnp.inf, jnp.float32))
        s, m = lax.fori_loop(0, n_chunks, c_body, init,
                             unroll=bool(n_chunks <= 8))

        # One lane-aligned window store per channel per image.
        pooled_ref[0, pl.ds(i, 1), pl.ds(map_off, HW)] = jnp.sum(
            s, axis=0, keepdims=True)
        pooled_ref[1, pl.ds(i, 1), pl.ds(map_off, HW)] = jnp.max(
            m, axis=0, keepdims=True)

    # ---------- Phase 2: KxK 2->1 conv as shifted MACs over the block -------
    # Tap (c, kh, kw) contributes  tap * pooled[c, o + (kh-P)*W + (kw-P)]  to
    # flat output position o. Out-of-range rows land in the zero guards;
    # out-of-range columns are removed by the per-kw mask.
    acc = jnp.zeros((bb, HW), jnp.float32)
    for kw in range(K):
        part = jnp.zeros((bb, HW), jnp.float32)
        for c in range(2):
            for kh in range(K):
                off = map_off + (kh - P) * W + (kw - P)
                tap = w_ref[c * K * K + kh * K + kw]
                part = part + tap * pooled_ref[c, :, pl.ds(off, HW)]
        acc = acc + mask_ref[pl.ds(kw, 1), :] * part

    o_ref[0] = jax.nn.sigmoid(acc).astype(o_ref.dtype)


def _pick_batch_block(B, per_item_vmem_bytes, target_bytes=2 << 20):
    """Largest divisor of B giving ~target_bytes of (double-buffered) input per
    grid step while keeping >= 2 grid steps (even when possible, so both v7x
    TensorCores get balanced work)."""
    if B <= 1:
        return 1
    target = max(1, target_bytes // max(per_item_vmem_bytes, 1))
    limit = min(target, max(1, B // 2))
    divisors = [d for d in range(1, B + 1) if B % d == 0 and d <= limit]
    if not divisors:
        return 1
    even = [d for d in divisors if (B // d) % 2 == 0]
    return max(even) if even else max(divisors)


def spatial_attention(x_nchw, conv_weight, *, batch_block=None):
    """sigmoid(conv2d(cat([mean_c(x), max_c(x)], 1), conv_weight)) -> (B,1,H,W).
    conv_weight: (1, 2, K, K), no bias."""
    B, C, H, W = x_nchw.shape
    K = conv_weight.shape[-1]
    assert conv_weight.shape == (1, 2, K, K) and K in (3, 7)
    P = K // 2
    HW = H * W

    # Free, layout-only reshape: flat spatial becomes the (lane) minor axis.
    x = x_nchw.reshape(B, C, HW)

    # Fold the 1/C of the channel mean into the avg-branch taps.
    w = conv_weight.astype(jnp.float32)
    w = w.at[0, 0].divide(float(C))
    w_flat = w.reshape(-1)                                    # (2*K*K,)

    # Per-kw valid-column masks (tiny constants).
    col = np.tile(np.arange(W, dtype=np.int64), H)            # (HW,)
    masks = np.stack(
        [((col >= P - kw) & (col <= W - 1 + P - kw)).astype(np.float32)
         for kw in range(K)], axis=0)                         # (K, HW)
    masks = jnp.asarray(masks)

    # Flat pooled-map geometry: map at 128-aligned lane offset map_off with
    # >= P*W+P zero guard lanes on each side (the conv's zero padding).
    guard = P * W + P
    map_off = _round_up(guard, 128)
    flat = _round_up(map_off + HW + guard, 128)

    # Channel chunk for the fused pooling pass (sublane-aligned when possible).
    c_chunk = 8
    while C % c_chunk:
        c_chunk //= 2

    # Batch block: ~2 MiB of tile-padded, double-buffered input per grid step.
    itemsize = jnp.dtype(x.dtype).itemsize
    c_pad, hw_pad = _round_up(C, 8), _round_up(HW, 128)
    per_item_in = 2 * c_pad * hw_pad * itemsize               # double-buffered
    bb = _pick_batch_block(B, per_item_in) if batch_block is None else batch_block
    assert B % bb == 0

    bb_pad = _round_up(bb, 8)
    vmem_bytes = (bb * per_item_in                            # input blocks
                  + 2 * bb_pad * hw_pad * 4                   # output blocks
                  + 2 * bb_pad * flat * 4                     # pooled scratch
                  + 2 * _round_up(K, 8) * hw_pad * 4          # masks
                  + (2 << 20))                                # headroom
    # <= 48 MiB keeps the same block choice safe on v7x's 64 MiB VMEM.
    vmem_limit = int(min(max(vmem_bytes, 16 << 20), 48 << 20))

    kernel = functools.partial(
        _spatial_attention_kernel,
        W=W, K=K, map_off=map_off, c_chunk=c_chunk)

    grid_spec = pltpu.PrefetchScalarGridSpec(
        num_scalar_prefetch=0,
        grid=(B // bb,),
        in_specs=[
            pl.BlockSpec(memory_space=pltpu.SMEM),             # conv taps
            pl.BlockSpec((K, HW), lambda b: (0, 0)),           # column masks
            pl.BlockSpec((bb, C, HW), lambda b: (b, 0, 0)),    # input block
        ],
        # (1, bb, HW) block over a (B//bb, bb, HW) output: last two dims are
        # full, the blocked axis is major, and the store is lane-dense.
        out_specs=pl.BlockSpec((1, bb, HW), lambda b: (b, 0, 0)),
        scratch_shapes=[pltpu.VMEM((2, bb, flat), jnp.float32)],
    )

    out = pl.pallas_call(
        kernel,
        out_shape=jax.ShapeDtypeStruct((B // bb, bb, HW), x.dtype),
        grid_spec=grid_spec,
        compiler_params=pltpu.CompilerParams(
            dimension_semantics=("parallel",),
            vmem_limit_bytes=vmem_limit,
        ),
    )(w_flat, masks, x)

    return out.reshape(B, 1, H, W)


def spatial_attention_reference(x, conv_weight):
    """Pure-JAX reference matching the PyTorch forward exactly (f32)."""
    P = conv_weight.shape[-1] // 2
    avg = jnp.mean(x, axis=1, keepdims=True)
    mx = jnp.max(x, axis=1, keepdims=True)
    cat = jnp.concatenate([avg, mx], axis=1)                   # (B, 2, H, W)
    y = lax.conv_general_dilated(
        cat, conv_weight.astype(cat.dtype), window_strides=(1, 1),
        padding=((P, P), (P, P)),
        dimension_numbers=("NCHW", "OIHW", "NCHW"),
        precision=lax.Precision.HIGHEST)
    return jax.nn.sigmoid(y)


if __name__ == "__main__":
    B, C, H, W = 2, 32, 16, 16
    K = 7
    key = jax.random.PRNGKey(0)
    kx, kw_key = jax.random.split(key)
    x = jax.random.normal(kx, (B, C, H, W), jnp.float32)
    # nn.Conv2d(2, 1, 7, padding=3, bias=False) weight
    w = 0.1 * jax.random.normal(kw_key, (1, 2, K, K), jnp.float32)

    out = spatial_attention(x, w)
    out = jax.block_until_ready(out)

    ref = spatial_attention_reference(x, w)
    assert out.shape == (B, 1, H, W)
    assert jnp.allclose(out, ref, atol=1e-4, rtol=1e-4), "mismatch vs reference"

    print("KERNEL_OK")
</pallas_src>

<mosaic_0001>
module attributes {stable_mosaic.version = 11 : i64} {
  func.func @_spatial_attention_kernel(%arg0: i32, %arg1: memref<98xf32, #tpu.memory_space<smem>>, %arg2: memref<7x256xf32, #tpu.memory_space<vmem>>, %arg3: memref<1x32x256xf32, #tpu.memory_space<vmem>>, %arg4: memref<1x1x256xf32, #tpu.memory_space<vmem>>, %arg5: memref<2x1x512xf32, #tpu.memory_space<vmem>>) attributes {dimension_semantics = [#tpu.dimension_semantics<parallel>], iteration_bounds = array<i64: 2>, scalar_prefetch = 0 : i64, scratch_operands = 1 : i64, tpu.core_type = #tpu.core_type<tc>, window_params = [{transform_indices = @transform_0, window_bounds = array<i64: 98>}, {pipeline_mode = #tpu.pipeline_mode<synchronous>, transform_indices = @transform_1, window_bounds = array<i64: 7, 256>}, {transform_indices = @transform_2, window_bounds = array<i64: 1, 32, 256>}, {transform_indices = @transform_3, window_bounds = array<i64: 1, 1, 256>}]} {
    %cst = arith.constant 0.000000e+00 : f32
    %0 = vector.broadcast %cst : f32 to vector<2x1x512xf32>
    %c0 = arith.constant 0 : index
    %c0_0 = arith.constant 0 : index
    %c0_1 = arith.constant 0 : index
    %1 = vector.load %arg5[%c0, %c0_0, %c0_1] : memref<2x1x512xf32, #tpu.memory_space<vmem>>, vector<2x1x512xf32>
    tpu.vector_store %arg5[%c0, %c0_0, %c0_1], %0 {strides = array<i32>} : memref<2x1x512xf32, #tpu.memory_space<vmem>>, vector<2x1x512xf32>,
    %c0_i32 = arith.constant 0 : i32
    %c1_i32 = arith.constant 1 : i32
    %2 = arith.muli %c0_i32, %c1_i32 : i32
    %c0_i32_2 = arith.constant 0 : i32
    %3 = arith.addi %c0_i32_2, %2 : i32
    %cst_3 = arith.constant 0.000000e+00 : f32
    %4 = vector.broadcast %cst_3 : f32 to vector<8x256xf32>
    %cst_4 = arith.constant 0xFF800000 : f32
    %5 = vector.broadcast %cst_4 : f32 to vector<8x256xf32>
    %c0_i32_5 = arith.constant 0 : i32
    %c8_i32 = arith.constant 8 : i32
    %6 = arith.muli %c0_i32_5, %c8_i32 : i32
    %7 = tpu.assume_multiple %6, 8 : i32
    %8 = arith.index_cast %3 : i32 to index
    %9 = arith.index_cast %7 : i32 to index
    %c0_6 = arith.constant 0 : index
    %10 = vector.load %arg3[%8, %9, %c0_6] : memref<1x32x256xf32, #tpu.memory_space<vmem>>, vector<1x8x256xf32>
    %11 = vector.shape_cast %10 : vector<1x8x256xf32> to vector<8x256xf32>
    %12 = arith.addf %4, %11 : vector<8x256xf32>
    %13 = arith.maximumf %5, %11 : vector<8x256xf32>
    %c1_i32_7 = arith.constant 1 : i32
    %c8_i32_8 = arith.constant 8 : i32
    %14 = arith.muli %c1_i32_7, %c8_i32_8 : i32
    %15 = tpu.assume_multiple %14, 8 : i32
    %16 = arith.index_cast %3 : i32 to index
    %17 = arith.index_cast %15 : i32 to index
    %c0_9 = arith.constant 0 : index
    %18 = vector.load %arg3[%16, %17, %c0_9] : memref<1x32x256xf32, #tpu.memory_space<vmem>>, vector<1x8x256xf32>
    %19 = vector.shape_cast %18 : vector<1x8x256xf32> to vector<8x256xf32>
    %20 = arith.addf %12, %19 : vector<8x256xf32>
    %21 = arith.maximumf %13, %19 : vector<8x256xf32>
    %c2_i32 = arith.constant 2 : i32
    %c8_i32_10 = arith.constant 8 : i32
    %22 = arith.muli %c2_i32, %c8_i32_10 : i32
    %23 = tpu.assume_multiple %22, 8 : i32
    %24 = arith.index_cast %3 : i32 to index
    %25 = arith.index_cast %23 : i32 to index
    %c0_11 = arith.constant 0 : index
    %26 = vector.load %arg3[%24, %25, %c0_11] : memref<1x32x256xf32, #tpu.memory_space<vmem>>, vector<1x8x256xf32>
    %27 = vector.shape_cast %26 : vector<1x8x256xf32> to vector<8x256xf32>
    %28 = arith.addf %20, %27 : vector<8x256xf32>
    %29 = arith.maximumf %21, %27 : vector<8x256xf32>
    %c3_i32 = arith.constant 3 : i32
    %c8_i32_12 = arith.constant 8 : i32
    %30 = arith.muli %c3_i32, %c8_i32_12 : i32
    %31 = tpu.assume_multiple %30, 8 : i32
    %32 = arith.index_cast %3 : i32 to index
    %33 = arith.index_cast %31 : i32 to index
    %c0_13 = arith.constant 0 : index
    %34 = vector.load %arg3[%32, %33, %c0_13] : memref<1x32x256xf32, #tpu.memory_space<vmem>>, vector<1x8x256xf32>
    %35 = vector.shape_cast %34 : vector<1x8x256xf32> to vector<8x256xf32>
    %36 = arith.addf %28, %35 : vector<8x256xf32>
    %37 = arith.maximumf %29, %35 : vector<8x256xf32>
    %c4_i32 = arith.constant 4 : i32
    %cst_14 = arith.constant dense<0.000000e+00> : vector<256xf32>
    %38 = vector.multi_reduction <add>, %36, %cst_14 [0] : vector<8x256xf32> to vector<256xf32>
    %39 = vector.shape_cast %38 : vector<256xf32> to vector<1x256xf32>
    %c0_15 = arith.constant 0 : index
    %40 = arith.index_cast %3 : i32 to index
    %c128 = arith.constant 128 : index
    %41 = vector.load %arg5[%c0_15, %40, %c128] : memref<2x1x512xf32, #tpu.memory_space<vmem>>, vector<1x1x256xf32>
    %42 = vector.shape_cast %41 : vector<1x1x256xf32> to vector<1x256xf32>
    %43 = vector.shape_cast %39 : vector<1x256xf32> to vector<1x1x256xf32>
    tpu.vector_store %arg5[%c0_15, %40, %c128], %43 {strides = array<i32>} : memref<2x1x512xf32, #tpu.memory_space<vmem>>, vector<1x1x256xf32>,
    %cst_16 = arith.constant dense<0xFF800000> : vector<256xf32>
    %44 = vector.multi_reduction <maximumf>, %37, %cst_16 [0] : vector<8x256xf32> to vector<256xf32>
    %45 = vector.shape_cast %44 : vector<256xf32> to vector<1x256xf32>
    %c1 = arith.constant 1 : index
    %46 = arith.index_cast %3 : i32 to index
    %c128_17 = arith.constant 128 : index
    %47 = vector.load %arg5[%c1, %46, %c128_17] : memref<2x1x512xf32, #tpu.memory_space<vmem>>, vector<1x1x256xf32>
    %48 = vector.shape_cast %47 : vector<1x1x256xf32> to vector<1x256xf32>
    %49 = vector.shape_cast %45 : vector<1x256xf32> to vector<1x1x256xf32>
    tpu.vector_store %arg5[%c1, %46, %c128_17], %49 {strides = array<i32>} : memref<2x1x512xf32, #tpu.memory_space<vmem>>, vector<1x1x256xf32>,
    %c1_i32_18 = arith.constant 1 : i32
    %cst_19 = arith.constant 0.000000e+00 : f32
    %50 = vector.broadcast %cst_19 : f32 to vector<1x256xf32>
    %cst_20 = arith.constant 0.000000e+00 : f32
    %51 = vector.broadcast %cst_20 : f32 to vector<1x256xf32>
    %c0_21 = arith.constant 0 : index
    %52 = memref.load %arg1[%c0_21] : memref<98xf32, #tpu.memory_space<smem>>
    %c0_22 = arith.constant 0 : index
    %c0_23 = arith.constant 0 : index
    %c77 = arith.constant 77 : index
    %53 = vector.load %arg5[%c0_22, %c0_23, %c77] : memref<2x1x512xf32, #tpu.memory_space<vmem>>, vector<1x1x256xf32>
    %54 = vector.shape_cast %53 : vector<1x1x256xf32> to vector<1x256xf32>
    %55 = vector.broadcast %52 : f32 to vector<1x256xf32>
    %56 = arith.mulf %55, %54 : vector<1x256xf32>
    %57 = arith.addf %51, %56 : vector<1x256xf32>
    %c7 = arith.constant 7 : index
    %58 = memref.load %arg1[%c7] : memref<98xf32, #tpu.memory_space<smem>>
    %c0_24 = arith.constant 0 : index
    %c0_25 = arith.constant 0 : index
    %c93 = arith.constant 93 : index
    %59 = vector.load %arg5[%c0_24, %c0_25, %c93] : memref<2x1x512xf32, #tpu.memory_space<vmem>>, vector<1x1x256xf32>
    %60 = vector.shape_cast %59 : vector<1x1x256xf32> to vector<1x256xf32>
    %61 = vector.broadcast %58 : f32 to vector<1x256xf32>
    %62 = arith.mulf %61, %60 : vector<1x256xf32>
    %63 = arith.addf %57, %62 : vector<1x256xf32>
    %c14 = arith.constant 14 : index
    %64 = memref.load %arg1[%c14] : memref<98xf32, #tpu.memory_space<smem>>
    %c0_26 = arith.constant 0 : index
    %c0_27 = arith.constant 0 : index
    %c109 = arith.constant 109 : index
    %65 = vector.load %arg5[%c0_26, %c0_27, %c109] : memref<2x1x512xf32, #tpu.memory_space<vmem>>, vector<1x1x256xf32>
    %66 = vector.shape_cast %65 : vector<1x1x256xf32> to vector<1x256xf32>
    %67 = vector.broadcast %64 : f32 to vector<1x256xf32>
    %68 = arith.mulf %67, %66 : vector<1x256xf32>
    %69 = arith.addf %63, %68 : vector<1x256xf32>
    %c21 = arith.constant 21 : index
    %70 = memref.load %arg1[%c21] : memref<98xf32, #tpu.memory_space<smem>>
    %c0_28 = arith.constant 0 : index
    %c0_29 = arith.constant 0 : index
    %c125 = arith.constant 125 : index
    %71 = vector.load %arg5[%c0_28, %c0_29, %c125] : memref<2x1x512xf32, #tpu.memory_space<vmem>>, vector<1x1x256xf32>
    %72 = vector.shape_cast %71 : vector<1x1x256xf32> to vector<1x256xf32>
    %73 = vector.broadcast %70 : f32 to vector<1x256xf32>
    %74 = arith.mulf %73, %72 : vector<1x256xf32>
    %75 = arith.addf %69, %74 : vector<1x256xf32>
    %c28 = arith.constant 28 : index
    %76 = memref.load %arg1[%c28] : memref<98xf32, #tpu.memory_space<smem>>
    %c0_30 = arith.constant 0 : index
    %c0_31 = arith.constant 0 : index
    %c141 = arith.constant 141 : index
    %77 = vector.load %arg5[%c0_30, %c0_31, %c141] : memref<2x1x512xf32, #tpu.memory_space<vmem>>, vector<1x1x256xf32>
    %78 = vector.shape_cast %77 : vector<1x1x256xf32> to vector<1x256xf32>
    %79 = vector.broadcast %76 : f32 to vector<1x256xf32>
    %80 = arith.mulf %79, %78 : vector<1x256xf32>
    %81 = arith.addf %75, %80 : vector<1x256xf32>
    %c35 = arith.constant 35 : index
    %82 = memref.load %arg1[%c35] : memref<98xf32, #tpu.memory_space<smem>>
    %c0_32 = arith.constant 0 : index
    %c0_33 = arith.constant 0 : index
    %c157 = arith.constant 157 : index
    %83 = vector.load %arg5[%c0_32, %c0_33, %c157] : memref<2x1x512xf32, #tpu.memory_space<vmem>>, vector<1x1x256xf32>
    %84 = vector.shape_cast %83 : vector<1x1x256xf32> to vector<1x256xf32>
    %85 = vector.broadcast %82 : f32 to vector<1x256xf32>
    %86 = arith.mulf %85, %84 : vector<1x256xf32>
    %87 = arith.addf %81, %86 : vector<1x256xf32>
    %c42 = arith.constant 42 : index
    %88 = memref.load %arg1[%c42] : memref<98xf32, #tpu.memory_space<smem>>
    %c0_34 = arith.constant 0 : index
    %c0_35 = arith.constant 0 : index
    %c173 = arith.constant 173 : index
    %89 = vector.load %arg5[%c0_34, %c0_35, %c173] : memref<2x1x512xf32, #tpu.memory_space<vmem>>, vector<1x1x256xf32>
    %90 = vector.shape_cast %89 : vector<1x1x256xf32> to vector<1x256xf32>
    %91 = vector.broadcast %88 : f32 to vector<1x256xf32>
    %92 = arith.mulf %91, %90 : vector<1x256xf32>
    %93 = arith.addf %87, %92 : vector<1x256xf32>
    %c49 = arith.constant 49 : index
    %94 = memref.load %arg1[%c49] : memref<98xf32, #tpu.memory_space<smem>>
    %c1_36 = arith.constant 1 : index
    %c0_37 = arith.constant 0 : index
    %c77_38 = arith.constant 77 : index
    %95 = vector.load %arg5[%c1_36, %c0_37, %c77_38] : memref<2x1x512xf32, #tpu.memory_space<vmem>>, vector<1x1x256xf32>
    %96 = vector.shape_cast %95 : vector<1x1x256xf32> to vector<1x256xf32>
    %97 = vector.broadcast %94 : f32 to vector<1x256xf32>
    %98 = arith.mulf %97, %96 : vector<1x256xf32>
    %99 = arith.addf %93, %98 : vector<1x256xf32>
    %c56 = arith.constant 56 : index
    %100 = memref.load %arg1[%c56] : memref<98xf32, #tpu.memory_space<smem>>
    %c1_39 = arith.constant 1 : index
    %c0_40 = arith.constant 0 : index
    %c93_41 = arith.constant 93 : index
    %101 = vector.load %arg5[%c1_39, %c0_40, %c93_41] : memref<2x1x512xf32, #tpu.memory_space<vmem>>, vector<1x1x256xf32>
    %102 = vector.shape_cast %101 : vector<1x1x256xf32> to vector<1x256xf32>
    %103 = vector.broadcast %100 : f32 to vector<1x256xf32>
    %104 = arith.mulf %103, %102 : vector<1x256xf32>
    %105 = arith.addf %99, %104 : vector<1x256xf32>
    %c63 = arith.constant 63 : index
    %106 = memref.load %arg1[%c63] : memref<98xf32, #tpu.memory_space<smem>>
    %c1_42 = arith.constant 1 : index
    %c0_43 = arith.constant 0 : index
    %c109_44 = arith.constant 109 : index
    %107 = vector.load %arg5[%c1_42, %c0_43, %c109_44] : memref<2x1x512xf32, #tpu.memory_space<vmem>>, vector<1x1x256xf32>
    %108 = vector.shape_cast %107 : vector<1x1x256xf32> to vector<1x256xf32>
    %109 = vector.broadcast %106 : f32 to vector<1x256xf32>
    %110 = arith.mulf %109, %108 : vector<1x256xf32>
    %111 = arith.addf %105, %110 : vector<1x256xf32>
    %c70 = arith.constant 70 : index
    %112 = memref.load %arg1[%c70] : memref<98xf32, #tpu.memory_space<smem>>
    %c1_45 = arith.constant 1 : index
    %c0_46 = arith.constant 0 : index
    %c125_47 = arith.constant 125 : index
    %113 = vector.load %arg5[%c1_45, %c0_46, %c125_47] : memref<2x1x512xf32, #tpu.memory_space<vmem>>, vector<1x1x256xf32>
    %114 = vector.shape_cast %113 : vector<1x1x256xf32> to vector<1x256xf32>
    %115 = vector.broadcast %112 : f32 to vector<1x256xf32>
    %116 = arith.mulf %115, %114 : vector<1x256xf32>
    %117 = arith.addf %111, %116 : vector<1x256xf32>
    %c77_48 = arith.constant 77 : index
    %118 = memref.load %arg1[%c77_48] : memref<98xf32, #tpu.memory_space<smem>>
    %c1_49 = arith.constant 1 : index
    %c0_50 = arith.constant 0 : index
    %c141_51 = arith.constant 141 : index
    %119 = vector.load %arg5[%c1_49, %c0_50, %c141_51] : memref<2x1x512xf32, #tpu.memory_space<vmem>>, vector<1x1x256xf32>
    %120 = vector.shape_cast %119 : vector<1x1x256xf32> to vector<1x256xf32>
    %121 = vector.broadcast %118 : f32 to vector<1x256xf32>
    %122 = arith.mulf %121, %120 : vector<1x256xf32>
    %123 = arith.addf %117, %122 : vector<1x256xf32>
    %c84 = arith.constant 84 : index
    %124 = memref.load %arg1[%c84] : memref<98xf32, #tpu.memory_space<smem>>
    %c1_52 = arith.constant 1 : index
    %c0_53 = arith.constant 0 : index
    %c157_54 = arith.constant 157 : index
    %125 = vector.load %arg5[%c1_52, %c0_53, %c157_54] : memref<2x1x512xf32, #tpu.memory_space<vmem>>, vector<1x1x256xf32>
    %126 = vector.shape_cast %125 : vector<1x1x256xf32> to vector<1x256xf32>
    %127 = vector.broadcast %124 : f32 to vector<1x256xf32>
    %128 = arith.mulf %127, %126 : vector<1x256xf32>
    %129 = arith.addf %123, %128 : vector<1x256xf32>
    %c91 = arith.constant 91 : index
    %130 = memref.load %arg1[%c91] : memref<98xf32, #tpu.memory_space<smem>>
    %c1_55 = arith.constant 1 : index
    %c0_56 = arith.constant 0 : index
    %c173_57 = arith.constant 173 : index
    %131 = vector.load %arg5[%c1_55, %c0_56, %c173_57] : memref<2x1x512xf32, #tpu.memory_space<vmem>>, vector<1x1x256xf32>
    %132 = vector.shape_cast %131 : vector<1x1x256xf32> to vector<1x256xf32>
    %133 = vector.broadcast %130 : f32 to vector<1x256xf32>
    %134 = arith.mulf %133, %132 : vector<1x256xf32>
    %135 = arith.addf %129, %134 : vector<1x256xf32>
    %c0_58 = arith.constant 0 : index
    %c0_59 = arith.constant 0 : index
    %136 = vector.load %arg2[%c0_58, %c0_59] : memref<7x256xf32, #tpu.memory_space<vmem>>, vector<1x256xf32>
    %137 = arith.mulf %136, %135 : vector<1x256xf32>
    %138 = arith.addf %50, %137 : vector<1x256xf32>
    %cst_60 = arith.constant 0.000000e+00 : f32
    %139 = vector.broadcast %cst_60 : f32 to vector<1x256xf32>
    %c1_61 = arith.constant 1 : index
    %140 = memref.load %arg1[%c1_61] : memref<98xf32, #tpu.memory_space<smem>>
    %c0_62 = arith.constant 0 : index
    %c0_63 = arith.constant 0 : index
    %c78 = arith.constant 78 : index
    %141 = vector.load %arg5[%c0_62, %c0_63, %c78] : memref<2x1x512xf32, #tpu.memory_space<vmem>>, vector<1x1x256xf32>
    %142 = vector.shape_cast %141 : vector<1x1x256xf32> to vector<1x256xf32>
    %143 = vector.broadcast %140 : f32 to vector<1x256xf32>
    %144 = arith.mulf %143, %142 : vector<1x256xf32>
    %145 = arith.addf %139, %144 : vector<1x256xf32>
    %c8 = arith.constant 8 : index
    %146 = memref.load %arg1[%c8] : memref<98xf32, #tpu.memory_space<smem>>
    %c0_64 = arith.constant 0 : index
    %c0_65 = arith.constant 0 : index
    %c94 = arith.constant 94 : index
    %147 = vector.load %arg5[%c0_64, %c0_65, %c94] : memref<2x1x512xf32, #tpu.memory_space<vmem>>, vector<1x1x256xf32>
    %148 = vector.shape_cast %147 : vector<1x1x256xf32> to vector<1x256xf32>
    %149 = vector.broadcast %146 : f32 to vector<1x256xf32>
    %150 = arith.mulf %149, %148 : vector<1x256xf32>
    %151 = arith.addf %145, %150 : vector<1x256xf32>
    %c15 = arith.constant 15 : index
    %152 = memref.load %arg1[%c15] : memref<98xf32, #tpu.memory_space<smem>>
    %c0_66 = arith.constant 0 : index
    %c0_67 = arith.constant 0 : index
    %c110 = arith.constant 110 : index
    %153 = vector.load %arg5[%c0_66, %c0_67, %c110] : memref<2x1x512xf32, #tpu.memory_space<vmem>>, vector<1x1x256xf32>
    %154 = vector.shape_cast %153 : vector<1x1x256xf32> to vector<1x256xf32>
    %155 = vector.broadcast %152 : f32 to vector<1x256xf32>
    %156 = arith.mulf %155, %154 : vector<1x256xf32>
    %157 = arith.addf %151, %156 : vector<1x256xf32>
    %c22 = arith.constant 22 : index
    %158 = memref.load %arg1[%c22] : memref<98xf32, #tpu.memory_space<smem>>
    %c0_68 = arith.constant 0 : index
    %c0_69 = arith.constant 0 : index
    %c126 = arith.constant 126 : index
    %159 = vector.load %arg5[%c0_68, %c0_69, %c126] : memref<2x1x512xf32, #tpu.memory_space<vmem>>, vector<1x1x256xf32>
    %160 = vector.shape_cast %159 : vector<1x1x256xf32> to vector<1x256xf32>
    %161 = vector.broadcast %158 : f32 to vector<1x256xf32>
    %162 = arith.mulf %161, %160 : vector<1x256xf32>
    %163 = arith.addf %157, %162 : vector<1x256xf32>
    %c29 = arith.constant 29 : index
    %164 = memref.load %arg1[%c29] : memref<98xf32, #tpu.memory_space<smem>>
    %c0_70 = arith.constant 0 : index
    %c0_71 = arith.constant 0 : index
    %c142 = arith.constant 142 : index
    %165 = vector.load %arg5[%c0_70, %c0_71, %c142] : memref<2x1x512xf32, #tpu.memory_space<vmem>>, vector<1x1x256xf32>
    %166 = vector.shape_cast %165 : vector<1x1x256xf32> to vector<1x256xf32>
    %167 = vector.broadcast %164 : f32 to vector<1x256xf32>
    %168 = arith.mulf %167, %166 : vector<1x256xf32>
    %169 = arith.addf %163, %168 : vector<1x256xf32>
    %c36 = arith.constant 36 : index
    %170 = memref.load %arg1[%c36] : memref<98xf32, #tpu.memory_space<smem>>
    %c0_72 = arith.constant 0 : index
    %c0_73 = arith.constant 0 : index
    %c158 = arith.constant 158 : index
    %171 = vector.load %arg5[%c0_72, %c0_73, %c158] : memref<2x1x512xf32, #tpu.memory_space<vmem>>, vector<1x1x256xf32>
    %172 = vector.shape_cast %171 : vector<1x1x256xf32> to vector<1x256xf32>
    %173 = vector.broadcast %170 : f32 to vector<1x256xf32>
    %174 = arith.mulf %173, %172 : vector<1x256xf32>
    %175 = arith.addf %169, %174 : vector<1x256xf32>
    %c43 = arith.constant 43 : index
    %176 = memref.load %arg1[%c43] : memref<98xf32, #tpu.memory_space<smem>>
    %c0_74 = arith.constant 0 : index
    %c0_75 = arith.constant 0 : index
    %c174 = arith.constant 174 : index
    %177 = vector.load %arg5[%c0_74, %c0_75, %c174] : memref<2x1x512xf32, #tpu.memory_space<vmem>>, vector<1x1x256xf32>
    %178 = vector.shape_cast %177 : vector<1x1x256xf32> to vector<1x256xf32>
    %179 = vector.broadcast %176 : f32 to vector<1x256xf32>
    %180 = arith.mulf %179, %178 : vector<1x256xf32>
    %181 = arith.addf %175, %180 : vector<1x256xf32>
    %c50 = arith.constant 50 : index
    %182 = memref.load %arg1[%c50] : memref<98xf32, #tpu.memory_space<smem>>
    %c1_76 = arith.constant 1 : index
    %c0_77 = arith.constant 0 : index
    %c78_78 = arith.constant 78 : index
    %183 = vector.load %arg5[%c1_76, %c0_77, %c78_78] : memref<2x1x512xf32, #tpu.memory_space<vmem>>, vector<1x1x256xf32>
    %184 = vector.shape_cast %183 : vector<1x1x256xf32> to vector<1x256xf32>
    %185 = vector.broadcast %182 : f32 to vector<1x256xf32>
    %186 = arith.mulf %185, %184 : vector<1x256xf32>
    %187 = arith.addf %181, %186 : vector<1x256xf32>
    %c57 = arith.constant 57 : index
    %188 = memref.load %arg1[%c57] : memref<98xf32, #tpu.memory_space<smem>>
    %c1_79 = arith.constant 1 : index
    %c0_80 = arith.constant 0 : index
    %c94_81 = arith.constant 94 : index
    %189 = vector.load %arg5[%c1_79, %c0_80, %c94_81] : memref<2x1x512xf32, #tpu.memory_space<vmem>>, vector<1x1x256xf32>
    %190 = vector.shape_cast %189 : vector<1x1x256xf32> to vector<1x256xf32>
    %191 = vector.broadcast %188 : f32 to vector<1x256xf32>
    %192 = arith.mulf %191, %190 : vector<1x256xf32>
    %193 = arith.addf %187, %192 : vector<1x256xf32>
    %c64 = arith.constant 64 : index
    %194 = memref.load %arg1[%c64] : memref<98xf32, #tpu.memory_space<smem>>
    %c1_82 = arith.constant 1 : index
    %c0_83 = arith.constant 0 : index
    %c110_84 = arith.constant 110 : index
    %195 = vector.load %arg5[%c1_82, %c0_83, %c110_84] : memref<2x1x512xf32, #tpu.memory_space<vmem>>, vector<1x1x256xf32>
    %196 = vector.shape_cast %195 : vector<1x1x256xf32> to vector<1x256xf32>
    %197 = vector.broadcast %194 : f32 to vector<1x256xf32>
    %198 = arith.mulf %197, %196 : vector<1x256xf32>
    %199 = arith.addf %193, %198 : vector<1x256xf32>
    %c71 = arith.constant 71 : index
    %200 = memref.load %arg1[%c71] : memref<98xf32, #tpu.memory_space<smem>>
    %c1_85 = arith.constant 1 : index
    %c0_86 = arith.constant 0 : index
    %c126_87 = arith.constant 126 : index
    %201 = vector.load %arg5[%c1_85, %c0_86, %c126_87] : memref<2x1x512xf32, #tpu.memory_space<vmem>>, vector<1x1x256xf32>
    %202 = vector.shape_cast %201 : vector<1x1x256xf32> to vector<1x256xf32>
    %203 = vector.broadcast %200 : f32 to vector<1x256xf32>
    %204 = arith.mulf %203, %202 : vector<1x256xf32>
    %205 = arith.addf %199, %204 : vector<1x256xf32>
    %c78_88 = arith.constant 78 : index
    %206 = memref.load %arg1[%c78_88] : memref<98xf32, #tpu.memory_space<smem>>
    %c1_89 = arith.constant 1 : index
    %c0_90 = arith.constant 0 : index
    %c142_91 = arith.constant 142 : index
    %207 = vector.load %arg5[%c1_89, %c0_90, %c142_91] : memref<2x1x512xf32, #tpu.memory_space<vmem>>, vector<1x1x256xf32>
    %208 = vector.shape_cast %207 : vector<1x1x256xf32> to vector<1x256xf32>
    %209 = vector.broadcast %206 : f32 to vector<1x256xf32>
    %210 = arith.mulf %209, %208 : vector<1x256xf32>
    %211 = arith.addf %205, %210 : vector<1x256xf32>
    %c85 = arith.constant 85 : index
    %212 = memref.load %arg1[%c85] : memref<98xf32, #tpu.memory_space<smem>>
    %c1_92 = arith.constant 1 : index
    %c0_93 = arith.constant 0 : index
    %c158_94 = arith.constant 158 : index
    %213 = vector.load %arg5[%c1_92, %c0_93, %c158_94] : memref<2x1x512xf32, #tpu.memory_space<vmem>>, vector<1x1x256xf32>
    %214 = vector.shape_cast %213 : vector<1x1x256xf32> to vector<1x256xf32>
    %215 = vector.broadcast %212 : f32 to vector<1x256xf32>
    %216 = arith.mulf %215, %214 : vector<1x256xf32>
    %217 = arith.addf %211, %216 : vector<1x256xf32>
    %c92 = arith.constant 92 : index
    %218 = memref.load %arg1[%c92] : memref<98xf32, #tpu.memory_space<smem>>
    %c1_95 = arith.constant 1 : index
    %c0_96 = arith.constant 0 : index
    %c174_97 = arith.constant 174 : index
    %219 = vector.load %arg5[%c1_95, %c0_96, %c174_97] : memref<2x1x512xf32, #tpu.memory_space<vmem>>, vector<1x1x256xf32>
    %220 = vector.shape_cast %219 : vector<1x1x256xf32> to vector<1x256xf32>
    %221 = vector.broadcast %218 : f32 to vector<1x256xf32>
    %222 = arith.mulf %221, %220 : vector<1x256xf32>
    %223 = arith.addf %217, %222 : vector<1x256xf32>
    %c1_98 = arith.constant 1 : index
    %c0_99 = arith.constant 0 : index
    %224 = vector.load %arg2[%c1_98, %c0_99] : memref<7x256xf32, #tpu.memory_space<vmem>>, vector<1x256xf32>
    %225 = arith.mulf %224, %223 : vector<1x256xf32>
    %226 = arith.addf %138, %225 : vector<1x256xf32>
    %cst_100 = arith.constant 0.000000e+00 : f32
    %227 = vector.broadcast %cst_100 : f32 to vector<1x256xf32>
    %c2 = arith.constant 2 : index
    %228 = memref.load %arg1[%c2] : memref<98xf32, #tpu.memory_space<smem>>
    %c0_101 = arith.constant 0 : index
    %c0_102 = arith.constant 0 : index
    %c79 = arith.constant 79 : index
    %229 = vector.load %arg5[%c0_101, %c0_102, %c79] : memref<2x1x512xf32, #tpu.memory_space<vmem>>, vector<1x1x256xf32>
    %230 = vector.shape_cast %229 : vector<1x1x256xf32> to vector<1x256xf32>
    %231 = vector.broadcast %228 : f32 to vector<1x256xf32>
    %232 = arith.mulf %231, %230 : vector<1x256xf32>
    %233 = arith.addf %227, %232 : vector<1x256xf32>
    %c9 = arith.constant 9 : index
    %234 = memref.load %arg1[%c9] : memref<98xf32, #tpu.memory_space<smem>>
    %c0_103 = arith.constant 0 : index
    %c0_104 = arith.constant 0 : index
    %c95 = arith.constant 95 : index
    %235 = vector.load %arg5[%c0_103, %c0_104, %c95] : memref<2x1x512xf32, #tpu.memory_space<vmem>>, vector<1x1x256xf32>
    %236 = vector.shape_cast %235 : vector<1x1x256xf32> to vector<1x256xf32>
    %237 = vector.broadcast %234 : f32 to vector<1x256xf32>
    %238 = arith.mulf %237, %236 : vector<1x256xf32>
    %239 = arith.addf %233, %238 : vector<1x256xf32>
    %c16 = arith.constant 16 : index
    %240 = memref.load %arg1[%c16] : memref<98xf32, #tpu.memory_space<smem>>
    %c0_105 = arith.constant 0 : index
    %c0_106 = arith.constant 0 : index
    %c111 = arith.constant 111 : index
    %241 = vector.load %arg5[%c0_105, %c0_106, %c111] : memref<2x1x512xf32, #tpu.memory_space<vmem>>, vector<1x1x256xf32>
    %242 = vector.shape_cast %241 : vector<1x1x256xf32> to vector<1x256xf32>
    %243 = vector.broadcast %240 : f32 to vector<1x256xf32>
    %244 = arith.mulf %243, %242 : vector<1x256xf32>
    %245 = arith.addf %239, %244 : vector<1x256xf32>
    %c23 = arith.constant 23 : index
    %246 = memref.load %arg1[%c23] : memref<98xf32, #tpu.memory_space<smem>>
    %c0_107 = arith.constant 0 : index
    %c0_108 = arith.constant 0 : index
    %c127 = arith.constant 127 : index
    %247 = vector.load %arg5[%c0_107, %c0_108, %c127] : memref<2x1x512xf32, #tpu.memory_space<vmem>>, vector<1x1x256xf32>
    %248 = vector.shape_cast %247 : vector<1x1x256xf32> to vector<1x256xf32>
    %249 = vector.broadcast %246 : f32 to vector<1x256xf32>
    %250 = arith.mulf %249, %248 : vector<1x256xf32>
    %251 = arith.addf %245, %250 : vector<1x256xf32>
    %c30 = arith.constant 30 : index
    %252 = memref.load %arg1[%c30] : memref<98xf32, #tpu.memory_space<smem>>
    %c0_109 = arith.constant 0 : index
    %c0_110 = arith.constant 0 : index
    %c143 = arith.constant 143 : index
    %253 = vector.load %arg5[%c0_109, %c0_110, %c143] : memref<2x1x512xf32, #tpu.memory_space<vmem>>, vector<1x1x256xf32>
    %254 = vector.shape_cast %253 : vector<1x1x256xf32> to vector<1x256xf32>
    %255 = vector.broadcast %252 : f32 to vector<1x256xf32>
    %256 = arith.mulf %255, %254 : vector<1x256xf32>
    %257 = arith.addf %251, %256 : vector<1x256xf32>
    %c37 = arith.constant 37 : index
    %258 = memref.load %arg1[%c37] : memref<98xf32, #tpu.memory_space<smem>>
    %c0_111 = arith.constant 0 : index
    %c0_112 = arith.constant 0 : index
    %c159 = arith.constant 159 : index
    %259 = vector.load %arg5[%c0_111, %c0_112, %c159] : memref<2x1x512xf32, #tpu.memory_space<vmem>>, vector<1x1x256xf32>
    %260 = vector.shape_cast %259 : vector<1x1x256xf32> to vector<1x256xf32>
    %261 = vector.broadcast %258 : f32 to vector<1x256xf32>
    %262 = arith.mulf %261, %260 : vector<1x256xf32>
    %263 = arith.addf %257, %262 : vector<1x256xf32>
    %c44 = arith.constant 44 : index
    %264 = memref.load %arg1[%c44] : memref<98xf32, #tpu.memory_space<smem>>
    %c0_113 = arith.constant 0 : index
    %c0_114 = arith.constant 0 : index
    %c175 = arith.constant 175 : index
    %265 = vector.load %arg5[%c0_113, %c0_114, %c175] : memref<2x1x512xf32, #tpu.memory_space<vmem>>, vector<1x1x256xf32>
    %266 = vector.shape_cast %265 : vector<1x1x256xf32> to vector<1x256xf32>
    %267 = vector.broadcast %264 : f32 to vector<1x256xf32>
    %268 = arith.mulf %267, %266 : vector<1x256xf32>
    %269 = arith.addf %263, %268 : vector<1x256xf32>
    %c51 = arith.constant 51 : index
    %270 = memref.load %arg1[%c51] : memref<98xf32, #tpu.memory_space<smem>>
    %c1_115 = arith.constant 1 : index
    %c0_116 = arith.constant 0 : index
    %c79_117 = arith.constant 79 : index
    %271 = vector.load %arg5[%c1_115, %c0_116, %c79_117] : memref<2x1x512xf32, #tpu.memory_space<vmem>>, vector<1x1x256xf32>
    %272 = vector.shape_cast %271 : vector<1x1x256xf32> to vector<1x256xf32>
    %273 = vector.broadcast %270 : f32 to vector<1x256xf32>
    %274 = arith.mulf %273, %272 : vector<1x256xf32>
    %275 = arith.addf %269, %274 : vector<1x256xf32>
    %c58 = arith.constant 58 : index
    %276 = memref.load %arg1[%c58] : memref<98xf32, #tpu.memory_space<smem>>
    %c1_118 = arith.constant 1 : index
    %c0_119 = arith.constant 0 : index
    %c95_120 = arith.constant 95 : index
    %277 = vector.load %arg5[%c1_118, %c0_119, %c95_120] : memref<2x1x512xf32, #tpu.memory_space<vmem>>, vector<1x1x256xf32>
    %278 = vector.shape_cast %277 : vector<1x1x256xf32> to vector<1x256xf32>
    %279 = vector.broadcast %276 : f32 to vector<1x256xf32>
    %280 = arith.mulf %279, %278 : vector<1x256xf32>
    %281 = arith.addf %275, %280 : vector<1x256xf32>
    %c65 = arith.constant 65 : index
    %282 = memref.load %arg1[%c65] : memref<98xf32, #tpu.memory_space<smem>>
    %c1_121 = arith.constant 1 : index
    %c0_122 = arith.constant 0 : index
    %c111_123 = arith.constant 111 : index
    %283 = vector.load %arg5[%c1_121, %c0_122, %c111_123] : memref<2x1x512xf32, #tpu.memory_space<vmem>>, vector<1x1x256xf32>
    %284 = vector.shape_cast %283 : vector<1x1x256xf32> to vector<1x256xf32>
    %285 = vector.broadcast %282 : f32 to vector<1x256xf32>
    %286 = arith.mulf %285, %284 : vector<1x256xf32>
    %287 = arith.addf %281, %286 : vector<1x256xf32>
    %c72 = arith.constant 72 : index
    %288 = memref.load %arg1[%c72] : memref<98xf32, #tpu.memory_space<smem>>
    %c1_124 = arith.constant 1 : index
    %c0_125 = arith.constant 0 : index
    %c127_126 = arith.constant 127 : index
    %289 = vector.load %arg5[%c1_124, %c0_125, %c127_126] : memref<2x1x512xf32, #tpu.memory_space<vmem>>, vector<1x1x256xf32>
    %290 = vector.shape_cast %289 : vector<1x1x256xf32> to vector<1x256xf32>
    %291 = vector.broadcast %288 : f32 to vector<1x256xf32>
    %292 = arith.mulf %291, %290 : vector<1x256xf32>
    %293 = arith.addf %287, %292 : vector<1x256xf32>
    %c79_127 = arith.constant 79 : index
    %294 = memref.load %arg1[%c79_127] : memref<98xf32, #tpu.memory_space<smem>>
    %c1_128 = arith.constant 1 : index
    %c0_129 = arith.constant 0 : index
    %c143_130 = arith.constant 143 : index
    %295 = vector.load %arg5[%c1_128, %c0_129, %c143_130] : memref<2x1x512xf32, #tpu.memory_space<vmem>>, vector<1x1x256xf32>
    %296 = vector.shape_cast %295 : vector<1x1x256xf32> to vector<1x256xf32>
    %297 = vector.broadcast %294 : f32 to vector<1x256xf32>
    %298 = arith.mulf %297, %296 : vector<1x256xf32>
    %299 = arith.addf %293, %298 : vector<1x256xf32>
    %c86 = arith.constant 86 : index
    %300 = memref.load %arg1[%c86] : memref<98xf32, #tpu.memory_space<smem>>
    %c1_131 = arith.constant 1 : index
    %c0_132 = arith.constant 0 : index
    %c159_133 = arith.constant 159 : index
    %301 = vector.load %arg5[%c1_131, %c0_132, %c159_133] : memref<2x1x512xf32, #tpu.memory_space<vmem>>, vector<1x1x256xf32>
    %302 = vector.shape_cast %301 : vector<1x1x256xf32> to vector<1x256xf32>
    %303 = vector.broadcast %300 : f32 to vector<1x256xf32>
    %304 = arith.mulf %303, %302 : vector<1x256xf32>
    %305 = arith.addf %299, %304 : vector<1x256xf32>
    %c93_134 = arith.constant 93 : index
    %306 = memref.load %arg1[%c93_134] : memref<98xf32, #tpu.memory_space<smem>>
    %c1_135 = arith.constant 1 : index
    %c0_136 = arith.constant 0 : index
    %c175_137 = arith.constant 175 : index
    %307 = vector.load %arg5[%c1_135, %c0_136, %c175_137] : memref<2x1x512xf32, #tpu.memory_space<vmem>>, vector<1x1x256xf32>
    %308 = vector.shape_cast %307 : vector<1x1x256xf32> to vector<1x256xf32>
    %309 = vector.broadcast %306 : f32 to vector<1x256xf32>
    %310 = arith.mulf %309, %308 : vector<1x256xf32>
    %311 = arith.addf %305, %310 : vector<1x256xf32>
    %c2_138 = arith.constant 2 : index
    %c0_139 = arith.constant 0 : index
    %312 = vector.load %arg2[%c2_138, %c0_139] : memref<7x256xf32, #tpu.memory_space<vmem>>, vector<1x256xf32>
    %313 = arith.mulf %312, %311 : vector<1x256xf32>
    %314 = arith.addf %226, %313 : vector<1x256xf32>
    %cst_140 = arith.constant 0.000000e+00 : f32
    %315 = vector.broadcast %cst_140 : f32 to vector<1x256xf32>
    %c3 = arith.constant 3 : index
    %316 = memref.load %arg1[%c3] : memref<98xf32, #tpu.memory_space<smem>>
    %c0_141 = arith.constant 0 : index
    %c0_142 = arith.constant 0 : index
    %c80 = arith.constant 80 : index
    %317 = vector.load %arg5[%c0_141, %c0_142, %c80] : memref<2x1x512xf32, #tpu.memory_space<vmem>>, vector<1x1x256xf32>
    %318 = vector.shape_cast %317 : vector<1x1x256xf32> to vector<1x256xf32>
    %319 = vector.broadcast %316 : f32 to vector<1x256xf32>
    %320 = arith.mulf %319, %318 : vector<1x256xf32>
    %321 = arith.addf %315, %320 : vector<1x256xf32>
    %c10 = arith.constant 10 : index
    %322 = memref.load %arg1[%c10] : memref<98xf32, #tpu.memory_space<smem>>
    %c0_143 = arith.constant 0 : index
    %c0_144 = arith.constant 0 : index
    %c96 = arith.constant 96 : index
    %323 = vector.load %arg5[%c0_143, %c0_144, %c96] : memref<2x1x512xf32, #tpu.memory_space<vmem>>, vector<1x1x256xf32>
    %324 = vector.shape_cast %323 : vector<1x1x256xf32> to vector<1x256xf32>
    %325 = vector.broadcast %322 : f32 to vector<1x256xf32>
    %326 = arith.mulf %325, %324 : vector<1x256xf32>
    %327 = arith.addf %321, %326 : vector<1x256xf32>
    %c17 = arith.constant 17 : index
    %328 = memref.load %arg1[%c17] : memref<98xf32, #tpu.memory_space<smem>>
    %c0_145 = arith.constant 0 : index
    %c0_146 = arith.constant 0 : index
    %c112 = arith.constant 112 : index
    %329 = vector.load %arg5[%c0_145, %c0_146, %c112] : memref<2x1x512xf32, #tpu.memory_space<vmem>>, vector<1x1x256xf32>
    %330 = vector.shape_cast %329 : vector<1x1x256xf32> to vector<1x256xf32>
    %331 = vector.broadcast %328 : f32 to vector<1x256xf32>
    %332 = arith.mulf %331, %330 : vector<1x256xf32>
    %333 = arith.addf %327, %332 : vector<1x256xf32>
    %c24 = arith.constant 24 : index
    %334 = memref.load %arg1[%c24] : memref<98xf32, #tpu.memory_space<smem>>
    %c0_147 = arith.constant 0 : index
    %c0_148 = arith.constant 0 : index
    %c128_149 = arith.constant 128 : index
    %335 = vector.load %arg5[%c0_147, %c0_148, %c128_149] : memref<2x1x512xf32, #tpu.memory_space<vmem>>, vector<1x1x256xf32>
    %336 = vector.shape_cast %335 : vector<1x1x256xf32> to vector<1x256xf32>
    %337 = vector.broadcast %334 : f32 to vector<1x256xf32>
    %338 = arith.mulf %337, %336 : vector<1x256xf32>
    %339 = arith.addf %333, %338 : vector<1x256xf32>
    %c31 = arith.constant 31 : index
    %340 = memref.load %arg1[%c31] : memref<98xf32, #tpu.memory_space<smem>>
    %c0_150 = arith.constant 0 : index
    %c0_151 = arith.constant 0 : index
    %c144 = arith.constant 144 : index
    %341 = vector.load %arg5[%c0_150, %c0_151, %c144] : memref<2x1x512xf32, #tpu.memory_space<vmem>>, vector<1x1x256xf32>
    %342 = vector.shape_cast %341 : vector<1x1x256xf32> to vector<1x256xf32>
    %343 = vector.broadcast %340 : f32 to vector<1x256xf32>
    %344 = arith.mulf %343, %342 : vector<1x256xf32>
    %345 = arith.addf %339, %344 : vector<1x256xf32>
    %c38 = arith.constant 38 : index
    %346 = memref.load %arg1[%c38] : memref<98xf32, #tpu.memory_space<smem>>
    %c0_152 = arith.constant 0 : index
    %c0_153 = arith.constant 0 : index
    %c160 = arith.constant 160 : index
    %347 = vector.load %arg5[%c0_152, %c0_153, %c160] : memref<2x1x512xf32, #tpu.memory_space<vmem>>, vector<1x1x256xf32>
    %348 = vector.shape_cast %347 : vector<1x1x256xf32> to vector<1x256xf32>
    %349 = vector.broadcast %346 : f32 to vector<1x256xf32>
    %350 = arith.mulf %349, %348 : vector<1x256xf32>
    %351 = arith.addf %345, %350 : vector<1x256xf32>
    %c45 = arith.constant 45 : index
    %352 = memref.load %arg1[%c45] : memref<98xf32, #tpu.memory_space<smem>>
    %c0_154 = arith.constant 0 : index
    %c0_155 = arith.constant 0 : index
    %c176 = arith.constant 176 : index
    %353 = vector.load %arg5[%c0_154, %c0_155, %c176] : memref<2x1x512xf32, #tpu.memory_space<vmem>>, vector<1x1x256xf32>
    %354 = vector.shape_cast %353 : vector<1x1x256xf32> to vector<1x256xf32>
    %355 = vector.broadcast %352 : f32 to vector<1x256xf32>
    %356 = arith.mulf %355, %354 : vector<1x256xf32>
    %357 = arith.addf %351, %356 : vector<1x256xf32>
    %c52 = arith.constant 52 : index
    %358 = memref.load %arg1[%c52] : memref<98xf32, #tpu.memory_space<smem>>
    %c1_156 = arith.constant 1 : index
    %c0_157 = arith.constant 0 : index
    %c80_158 = arith.constant 80 : index
    %359 = vector.load %arg5[%c1_156, %c0_157, %c80_158] : memref<2x1x512xf32, #tpu.memory_space<vmem>>, vector<1x1x256xf32>
    %360 = vector.shape_cast %359 : vector<1x1x256xf32> to vector<1x256xf32>
    %361 = vector.broadcast %358 : f32 to vector<1x256xf32>
    %362 = arith.mulf %361, %360 : vector<1x256xf32>
    %363 = arith.addf %357, %362 : vector<1x256xf32>
    %c59 = arith.constant 59 : index
    %364 = memref.load %arg1[%c59] : memref<98xf32, #tpu.memory_space<smem>>
    %c1_159 = arith.constant 1 : index
    %c0_160 = arith.constant 0 : index
    %c96_161 = arith.constant 96 : index
    %365 = vector.load %arg5[%c1_159, %c0_160, %c96_161] : memref<2x1x512xf32, #tpu.memory_space<vmem>>, vector<1x1x256xf32>
    %366 = vector.shape_cast %365 : vector<1x1x256xf32> to vector<1x256xf32>
    %367 = vector.broadcast %364 : f32 to vector<1x256xf32>
    %368 = arith.mulf %367, %366 : vector<1x256xf32>
    %369 = arith.addf %363, %368 : vector<1x256xf32>
    %c66 = arith.constant 66 : index
    %370 = memref.load %arg1[%c66] : memref<98xf32, #tpu.memory_space<smem>>
    %c1_162 = arith.constant 1 : index
    %c0_163 = arith.constant 0 : index
    %c112_164 = arith.constant 112 : index
    %371 = vector.load %arg5[%c1_162, %c0_163, %c112_164] : memref<2x1x512xf32, #tpu.memory_space<vmem>>, vector<1x1x256xf32>
    %372 = vector.shape_cast %371 : vector<1x1x256xf32> to vector<1x256xf32>
    %373 = vector.broadcast %370 : f32 to vector<1x256xf32>
    %374 = arith.mulf %373, %372 : vector<1x256xf32>
    %375 = arith.addf %369, %374 : vector<1x256xf32>
    %c73 = arith.constant 73 : index
    %376 = memref.load %arg1[%c73] : memref<98xf32, #tpu.memory_space<smem>>
    %c1_165 = arith.constant 1 : index
    %c0_166 = arith.constant 0 : index
    %c128_167 = arith.constant 128 : index
    %377 = vector.load %arg5[%c1_165, %c0_166, %c128_167] : memref<2x1x512xf32, #tpu.memory_space<vmem>>, vector<1x1x256xf32>
    %378 = vector.shape_cast %377 : vector<1x1x256xf32> to vector<1x256xf32>
    %379 = vector.broadcast %376 : f32 to vector<1x256xf32>
    %380 = arith.mulf %379, %378 : vector<1x256xf32>
    %381 = arith.addf %375, %380 : vector<1x256xf32>
    %c80_168 = arith.constant 80 : index
    %382 = memref.load %arg1[%c80_168] : memref<98xf32, #tpu.memory_space<smem>>
    %c1_169 = arith.constant 1 : index
    %c0_170 = arith.constant 0 : index
    %c144_171 = arith.constant 144 : index
    %383 = vector.load %arg5[%c1_169, %c0_170, %c144_171] : memref<2x1x512xf32, #tpu.memory_space<vmem>>, vector<1x1x256xf32>
    %384 = vector.shape_cast %383 : vector<1x1x256xf32> to vector<1x256xf32>
    %385 = vector.broadcast %382 : f32 to vector<1x256xf32>
    %386 = arith.mulf %385, %384 : vector<1x256xf32>
    %387 = arith.addf %381, %386 : vector<1x256xf32>
    %c87 = arith.constant 87 : index
    %388 = memref.load %arg1[%c87] : memref<98xf32, #tpu.memory_space<smem>>
    %c1_172 = arith.constant 1 : index
    %c0_173 = arith.constant 0 : index
    %c160_174 = arith.constant 160 : index
    %389 = vector.load %arg5[%c1_172, %c0_173, %c160_174] : memref<2x1x512xf32, #tpu.memory_space<vmem>>, vector<1x1x256xf32>
    %390 = vector.shape_cast %389 : vector<1x1x256xf32> to vector<1x256xf32>
    %391 = vector.broadcast %388 : f32 to vector<1x256xf32>
    %392 = arith.mulf %391, %390 : vector<1x256xf32>
    %393 = arith.addf %387, %392 : vector<1x256xf32>
    %c94_175 = arith.constant 94 : index
    %394 = memref.load %arg1[%c94_175] : memref<98xf32, #tpu.memory_space<smem>>
    %c1_176 = arith.constant 1 : index
    %c0_177 = arith.constant 0 : index
    %c176_178 = arith.constant 176 : index
    %395 = vector.load %arg5[%c1_176, %c0_177, %c176_178] : memref<2x1x512xf32, #tpu.memory_space<vmem>>, vector<1x1x256xf32>
    %396 = vector.shape_cast %395 : vector<1x1x256xf32> to vector<1x256xf32>
    %397 = vector.broadcast %394 : f32 to vector<1x256xf32>
    %398 = arith.mulf %397, %396 : vector<1x256xf32>
    %399 = arith.addf %393, %398 : vector<1x256xf32>
    %c3_179 = arith.constant 3 : index
    %c0_180 = arith.constant 0 : index
    %400 = vector.load %arg2[%c3_179, %c0_180] : memref<7x256xf32, #tpu.memory_space<vmem>>, vector<1x256xf32>
    %401 = arith.mulf %400, %399 : vector<1x256xf32>
    %402 = arith.addf %314, %401 : vector<1x256xf32>
    %cst_181 = arith.constant 0.000000e+00 : f32
    %403 = vector.broadcast %cst_181 : f32 to vector<1x256xf32>
    %c4 = arith.constant 4 : index
    %404 = memref.load %arg1[%c4] : memref<98xf32, #tpu.memory_space<smem>>
    %c0_182 = arith.constant 0 : index
    %c0_183 = arith.constant 0 : index
    %c81 = arith.constant 81 : index
    %405 = vector.load %arg5[%c0_182, %c0_183, %c81] : memref<2x1x512xf32, #tpu.memory_space<vmem>>, vector<1x1x256xf32>
    %406 = vector.shape_cast %405 : vector<1x1x256xf32> to vector<1x256xf32>
    %407 = vector.broadcast %404 : f32 to vector<1x256xf32>
    %408 = arith.mulf %407, %406 : vector<1x256xf32>
    %409 = arith.addf %403, %408 : vector<1x256xf32>
    %c11 = arith.constant 11 : index
    %410 = memref.load %arg1[%c11] : memref<98xf32, #tpu.memory_space<smem>>
    %c0_184 = arith.constant 0 : index
    %c0_185 = arith.constant 0 : index
    %c97 = arith.constant 97 : index
    %411 = vector.load %arg5[%c0_184, %c0_185, %c97] : memref<2x1x512xf32, #tpu.memory_space<vmem>>, vector<1x1x256xf32>
    %412 = vector.shape_cast %411 : vector<1x1x256xf32> to vector<1x256xf32>
    %413 = vector.broadcast %410 : f32 to vector<1x256xf32>
    %414 = arith.mulf %413, %412 : vector<1x256xf32>
    %415 = arith.addf %409, %414 : vector<1x256xf32>
    %c18 = arith.constant 18 : index
    %416 = memref.load %arg1[%c18] : memref<98xf32, #tpu.memory_space<smem>>
    %c0_186 = arith.constant 0 : index
    %c0_187 = arith.constant 0 : index
    %c113 = arith.constant 113 : index
    %417 = vector.load %arg5[%c0_186, %c0_187, %c113] : memref<2x1x512xf32, #tpu.memory_space<vmem>>, vector<1x1x256xf32>
    %418 = vector.shape_cast %417 : vector<1x1x256xf32> to vector<1x256xf32>
    %419 = vector.broadcast %416 : f32 to vector<1x256xf32>
    %420 = arith.mulf %419, %418 : vector<1x256xf32>
    %421 = arith.addf %415, %420 : vector<1x256xf32>
    %c25 = arith.constant 25 : index
    %422 = memref.load %arg1[%c25] : memref<98xf32, #tpu.memory_space<smem>>
    %c0_188 = arith.constant 0 : index
    %c0_189 = arith.constant 0 : index
    %c129 = arith.constant 129 : index
    %423 = vector.load %arg5[%c0_188, %c0_189, %c129] : memref<2x1x512xf32, #tpu.memory_space<vmem>>, vector<1x1x256xf32>
    %424 = vector.shape_cast %423 : vector<1x1x256xf32> to vector<1x256xf32>
    %425 = vector.broadcast %422 : f32 to vector<1x256xf32>
    %426 = arith.mulf %425, %424 : vector<1x256xf32>
    %427 = arith.addf %421, %426 : vector<1x256xf32>
    %c32 = arith.constant 32 : index
    %428 = memref.load %arg1[%c32] : memref<98xf32, #tpu.memory_space<smem>>
    %c0_190 = arith.constant 0 : index
    %c0_191 = arith.constant 0 : index
    %c145 = arith.constant 145 : index
    %429 = vector.load %arg5[%c0_190, %c0_191, %c145] : memref<2x1x512xf32, #tpu.memory_space<vmem>>, vector<1x1x256xf32>
    %430 = vector.shape_cast %429 : vector<1x1x256xf32> to vector<1x256xf32>
    %431 = vector.broadcast %428 : f32 to vector<1x256xf32>
    %432 = arith.mulf %431, %430 : vector<1x256xf32>
    %433 = arith.addf %427, %432 : vector<1x256xf32>
    %c39 = arith.constant 39 : index
    %434 = memref.load %arg1[%c39] : memref<98xf32, #tpu.memory_space<smem>>
    %c0_192 = arith.constant 0 : index
    %c0_193 = arith.constant 0 : index
    %c161 = arith.constant 161 : index
    %435 = vector.load %arg5[%c0_192, %c0_193, %c161] : memref<2x1x512xf32, #tpu.memory_space<vmem>>, vector<1x1x256xf32>
    %436 = vector.shape_cast %435 : vector<1x1x256xf32> to vector<1x256xf32>
    %437 = vector.broadcast %434 : f32 to vector<1x256xf32>
    %438 = arith.mulf %437, %436 : vector<1x256xf32>
    %439 = arith.addf %433, %438 : vector<1x256xf32>
    %c46 = arith.constant 46 : index
    %440 = memref.load %arg1[%c46] : memref<98xf32, #tpu.memory_space<smem>>
    %c0_194 = arith.constant 0 : index
    %c0_195 = arith.constant 0 : index
    %c177 = arith.constant 177 : index
    %441 = vector.load %arg5[%c0_194, %c0_195, %c177] : memref<2x1x512xf32, #tpu.memory_space<vmem>>, vector<1x1x256xf32>
    %442 = vector.shape_cast %441 : vector<1x1x256xf32> to vector<1x256xf32>
    %443 = vector.broadcast %440 : f32 to vector<1x256xf32>
    %444 = arith.mulf %443, %442 : vector<1x256xf32>
    %445 = arith.addf %439, %444 : vector<1x256xf32>
    %c53 = arith.constant 53 : index
    %446 = memref.load %arg1[%c53] : memref<98xf32, #tpu.memory_space<smem>>
    %c1_196 = arith.constant 1 : index
    %c0_197 = arith.constant 0 : index
    %c81_198 = arith.constant 81 : index
    %447 = vector.load %arg5[%c1_196, %c0_197, %c81_198] : memref<2x1x512xf32, #tpu.memory_space<vmem>>, vector<1x1x256xf32>
    %448 = vector.shape_cast %447 : vector<1x1x256xf32> to vector<1x256xf32>
    %449 = vector.broadcast %446 : f32 to vector<1x256xf32>
    %450 = arith.mulf %449, %448 : vector<1x256xf32>
    %451 = arith.addf %445, %450 : vector<1x256xf32>
    %c60 = arith.constant 60 : index
    %452 = memref.load %arg1[%c60] : memref<98xf32, #tpu.memory_space<smem>>
    %c1_199 = arith.constant 1 : index
    %c0_200 = arith.constant 0 : index
    %c97_201 = arith.constant 97 : index
    %453 = vector.load %arg5[%c1_199, %c0_200, %c97_201] : memref<2x1x512xf32, #tpu.memory_space<vmem>>, vector<1x1x256xf32>
    %454 = vector.shape_cast %453 : vector<1x1x256xf32> to vector<1x256xf32>
    %455 = vector.broadcast %452 : f32 to vector<1x256xf32>
    %456 = arith.mulf %455, %454 : vector<1x256xf32>
    %457 = arith.addf %451, %456 : vector<1x256xf32>
    %c67 = arith.constant 67 : index
    %458 = memref.load %arg1[%c67] : memref<98xf32, #tpu.memory_space<smem>>
    %c1_202 = arith.constant 1 : index
    %c0_203 = arith.constant 0 : index
    %c113_204 = arith.constant 113 : index
    %459 = vector.load %arg5[%c1_202, %c0_203, %c113_204] : memref<2x1x512xf32, #tpu.memory_space<vmem>>, vector<1x1x256xf32>
    %460 = vector.shape_cast %459 : vector<1x1x256xf32> to vector<1x256xf32>
    %461 = vector.broadcast %458 : f32 to vector<1x256xf32>
    %462 = arith.mulf %461, %460 : vector<1x256xf32>
    %463 = arith.addf %457, %462 : vector<1x256xf32>
    %c74 = arith.constant 74 : index
    %464 = memref.load %arg1[%c74] : memref<98xf32, #tpu.memory_space<smem>>
    %c1_205 = arith.constant 1 : index
    %c0_206 = arith.constant 0 : index
    %c129_207 = arith.constant 129 : index
    %465 = vector.load %arg5[%c1_205, %c0_206, %c129_207] : memref<2x1x512xf32, #tpu.memory_space<vmem>>, vector<1x1x256xf32>
    %466 = vector.shape_cast %465 : vector<1x1x256xf32> to vector<1x256xf32>
    %467 = vector.broadcast %464 : f32 to vector<1x256xf32>
    %468 = arith.mulf %467, %466 : vector<1x256xf32>
    %469 = arith.addf %463, %468 : vector<1x256xf32>
    %c81_208 = arith.constant 81 : index
    %470 = memref.load %arg1[%c81_208] : memref<98xf32, #tpu.memory_space<smem>>
    %c1_209 = arith.constant 1 : index
    %c0_210 = arith.constant 0 : index
    %c145_211 = arith.constant 145 : index
    %471 = vector.load %arg5[%c1_209, %c0_210, %c145_211] : memref<2x1x512xf32, #tpu.memory_space<vmem>>, vector<1x1x256xf32>
    %472 = vector.shape_cast %471 : vector<1x1x256xf32> to vector<1x256xf32>
    %473 = vector.broadcast %470 : f32 to vector<1x256xf32>
    %474 = arith.mulf %473, %472 : vector<1x256xf32>
    %475 = arith.addf %469, %474 : vector<1x256xf32>
    %c88 = arith.constant 88 : index
    %476 = memref.load %arg1[%c88] : memref<98xf32, #tpu.memory_space<smem>>
    %c1_212 = arith.constant 1 : index
    %c0_213 = arith.constant 0 : index
    %c161_214 = arith.constant 161 : index
    %477 = vector.load %arg5[%c1_212, %c0_213, %c161_214] : memref<2x1x512xf32, #tpu.memory_space<vmem>>, vector<1x1x256xf32>
    %478 = vector.shape_cast %477 : vector<1x1x256xf32> to vector<1x256xf32>
    %479 = vector.broadcast %476 : f32 to vector<1x256xf32>
    %480 = arith.mulf %479, %478 : vector<1x256xf32>
    %481 = arith.addf %475, %480 : vector<1x256xf32>
    %c95_215 = arith.constant 95 : index
    %482 = memref.load %arg1[%c95_215] : memref<98xf32, #tpu.memory_space<smem>>
    %c1_216 = arith.constant 1 : index
    %c0_217 = arith.constant 0 : index
    %c177_218 = arith.constant 177 : index
    %483 = vector.load %arg5[%c1_216, %c0_217, %c177_218] : memref<2x1x512xf32, #tpu.memory_space<vmem>>, vector<1x1x256xf32>
    %484 = vector.shape_cast %483 : vector<1x1x256xf32> to vector<1x256xf32>
    %485 = vector.broadcast %482 : f32 to vector<1x256xf32>
    %486 = arith.mulf %485, %484 : vector<1x256xf32>
    %487 = arith.addf %481, %486 : vector<1x256xf32>
    %c4_219 = arith.constant 4 : index
    %c0_220 = arith.constant 0 : index
    %488 = vector.load %arg2[%c4_219, %c0_220] : memref<7x256xf32, #tpu.memory_space<vmem>>, vector<1x256xf32>
    %489 = arith.mulf %488, %487 : vector<1x256xf32>
    %490 = arith.addf %402, %489 : vector<1x256xf32>
    %cst_221 = arith.constant 0.000000e+00 : f32
    %491 = vector.broadcast %cst_221 : f32 to vector<1x256xf32>
    %c5 = arith.constant 5 : index
    %492 = memref.load %arg1[%c5] : memref<98xf32, #tpu.memory_space<smem>>
    %c0_222 = arith.constant 0 : index
    %c0_223 = arith.constant 0 : index
    %c82 = arith.constant 82 : index
    %493 = vector.load %arg5[%c0_222, %c0_223, %c82] : memref<2x1x512xf32, #tpu.memory_space<vmem>>, vector<1x1x256xf32>
    %494 = vector.shape_cast %493 : vector<1x1x256xf32> to vector<1x256xf32>
    %495 = vector.broadcast %492 : f32 to vector<1x256xf32>
    %496 = arith.mulf %495, %494 : vector<1x256xf32>
    %497 = arith.addf %491, %496 : vector<1x256xf32>
    %c12 = arith.constant 12 : index
    %498 = memref.load %arg1[%c12] : memref<98xf32, #tpu.memory_space<smem>>
    %c0_224 = arith.constant 0 : index
    %c0_225 = arith.constant 0 : index
    %c98 = arith.constant 98 : index
    %499 = vector.load %arg5[%c0_224, %c0_225, %c98] : memref<2x1x512xf32, #tpu.memory_space<vmem>>, vector<1x1x256xf32>
    %500 = vector.shape_cast %499 : vector<1x1x256xf32> to vector<1x256xf32>
    %501 = vector.broadcast %498 : f32 to vector<1x256xf32>
    %502 = arith.mulf %501, %500 : vector<1x256xf32>
    %503 = arith.addf %497, %502 : vector<1x256xf32>
    %c19 = arith.constant 19 : index
    %504 = memref.load %arg1[%c19] : memref<98xf32, #tpu.memory_space<smem>>
    %c0_226 = arith.constant 0 : index
    %c0_227 = arith.constant 0 : index
    %c114 = arith.constant 114 : index
    %505 = vector.load %arg5[%c0_226, %c0_227, %c114] : memref<2x1x512xf32, #tpu.memory_space<vmem>>, vector<1x1x256xf32>
    %506 = vector.shape_cast %505 : vector<1x1x256xf32> to vector<1x256xf32>
    %507 = vector.broadcast %504 : f32 to vector<1x256xf32>
    %508 = arith.mulf %507, %506 : vector<1x256xf32>
    %509 = arith.addf %503, %508 : vector<1x256xf32>
    %c26 = arith.constant 26 : index
    %510 = memref.load %arg1[%c26] : memref<98xf32, #tpu.memory_space<smem>>
    %c0_228 = arith.constant 0 : index
    %c0_229 = arith.constant 0 : index
    %c130 = arith.constant 130 : index
    %511 = vector.load %arg5[%c0_228, %c0_229, %c130] : memref<2x1x512xf32, #tpu.memory_space<vmem>>, vector<1x1x256xf32>
    %512 = vector.shape_cast %511 : vector<1x1x256xf32> to vector<1x256xf32>
    %513 = vector.broadcast %510 : f32 to vector<1x256xf32>
    %514 = arith.mulf %513, %512 : vector<1x256xf32>
    %515 = arith.addf %509, %514 : vector<1x256xf32>
    %c33 = arith.constant 33 : index
    %516 = memref.load %arg1[%c33] : memref<98xf32, #tpu.memory_space<smem>>
    %c0_230 = arith.constant 0 : index
    %c0_231 = arith.constant 0 : index
    %c146 = arith.constant 146 : index
    %517 = vector.load %arg5[%c0_230, %c0_231, %c146] : memref<2x1x512xf32, #tpu.memory_space<vmem>>, vector<1x1x256xf32>
    %518 = vector.shape_cast %517 : vector<1x1x256xf32> to vector<1x256xf32>
    %519 = vector.broadcast %516 : f32 to vector<1x256xf32>
    %520 = arith.mulf %519, %518 : vector<1x256xf32>
    %521 = arith.addf %515, %520 : vector<1x256xf32>
    %c40 = arith.constant 40 : index
    %522 = memref.load %arg1[%c40] : memref<98xf32, #tpu.memory_space<smem>>
    %c0_232 = arith.constant 0 : index
    %c0_233 = arith.constant 0 : index
    %c162 = arith.constant 162 : index
    %523 = vector.load %arg5[%c0_232, %c0_233, %c162] : memref<2x1x512xf32, #tpu.memory_space<vmem>>, vector<1x1x256xf32>
    %524 = vector.shape_cast %523 : vector<1x1x256xf32> to vector<1x256xf32>
    %525 = vector.broadcast %522 : f32 to vector<1x256xf32>
    %526 = arith.mulf %525, %524 : vector<1x256xf32>
    %527 = arith.addf %521, %526 : vector<1x256xf32>
    %c47 = arith.constant 47 : index
    %528 = memref.load %arg1[%c47] : memref<98xf32, #tpu.memory_space<smem>>
    %c0_234 = arith.constant 0 : index
    %c0_235 = arith.constant 0 : index
    %c178 = arith.constant 178 : index
    %529 = vector.load %arg5[%c0_234, %c0_235, %c178] : memref<2x1x512xf32, #tpu.memory_space<vmem>>, vector<1x1x256xf32>
    %530 = vector.shape_cast %529 : vector<1x1x256xf32> to vector<1x256xf32>
    %531 = vector.broadcast %528 : f32 to vector<1x256xf32>
    %532 = arith.mulf %531, %530 : vector<1x256xf32>
    %533 = arith.addf %527, %532 : vector<1x256xf32>
    %c54 = arith.constant 54 : index
    %534 = memref.load %arg1[%c54] : memref<98xf32, #tpu.memory_space<smem>>
    %c1_236 = arith.constant 1 : index
    %c0_237 = arith.constant 0 : index
    %c82_238 = arith.constant 82 : index
    %535 = vector.load %arg5[%c1_236, %c0_237, %c82_238] : memref<2x1x512xf32, #tpu.memory_space<vmem>>, vector<1x1x256xf32>
    %536 = vector.shape_cast %535 : vector<1x1x256xf32> to vector<1x256xf32>
    %537 = vector.broadcast %534 : f32 to vector<1x256xf32>
    %538 = arith.mulf %537, %536 : vector<1x256xf32>
    %539 = arith.addf %533, %538 : vector<1x256xf32>
    %c61 = arith.constant 61 : index
    %540 = memref.load %arg1[%c61] : memref<98xf32, #tpu.memory_space<smem>>
    %c1_239 = arith.constant 1 : index
    %c0_240 = arith.constant 0 : index
    %c98_241 = arith.constant 98 : index
    %541 = vector.load %arg5[%c1_239, %c0_240, %c98_241] : memref<2x1x512xf32, #tpu.memory_space<vmem>>, vector<1x1x256xf32>
    %542 = vector.shape_cast %541 : vector<1x1x256xf32> to vector<1x256xf32>
    %543 = vector.broadcast %540 : f32 to vector<1x256xf32>
    %544 = arith.mulf %543, %542 : vector<1x256xf32>
    %545 = arith.addf %539, %544 : vector<1x256xf32>
    %c68 = arith.constant 68 : index
    %546 = memref.load %arg1[%c68] : memref<98xf32, #tpu.memory_space<smem>>
    %c1_242 = arith.constant 1 : index
    %c0_243 = arith.constant 0 : index
    %c114_244 = arith.constant 114 : index
    %547 = vector.load %arg5[%c1_242, %c0_243, %c114_244] : memref<2x1x512xf32, #tpu.memory_space<vmem>>, vector<1x1x256xf32>
    %548 = vector.shape_cast %547 : vector<1x1x256xf32> to vector<1x256xf32>
    %549 = vector.broadcast %546 : f32 to vector<1x256xf32>
    %550 = arith.mulf %549, %548 : vector<1x256xf32>
    %551 = arith.addf %545, %550 : vector<1x256xf32>
    %c75 = arith.constant 75 : index
    %552 = memref.load %arg1[%c75] : memref<98xf32, #tpu.memory_space<smem>>
    %c1_245 = arith.constant 1 : index
    %c0_246 = arith.constant 0 : index
    %c130_247 = arith.constant 130 : index
    %553 = vector.load %arg5[%c1_245, %c0_246, %c130_247] : memref<2x1x512xf32, #tpu.memory_space<vmem>>, vector<1x1x256xf32>
    %554 = vector.shape_cast %553 : vector<1x1x256xf32> to vector<1x256xf32>
    %555 = vector.broadcast %552 : f32 to vector<1x256xf32>
    %556 = arith.mulf %555, %554 : vector<1x256xf32>
    %557 = arith.addf %551, %556 : vector<1x256xf32>
    %c82_248 = arith.constant 82 : index
    %558 = memref.load %arg1[%c82_248] : memref<98xf32, #tpu.memory_space<smem>>
    %c1_249 = arith.constant 1 : index
    %c0_250 = arith.constant 0 : index
    %c146_251 = arith.constant 146 : index
    %559 = vector.load %arg5[%c1_249, %c0_250, %c146_251] : memref<2x1x512xf32, #tpu.memory_space<vmem>>, vector<1x1x256xf32>
    %560 = vector.shape_cast %559 : vector<1x1x256xf32> to vector<1x256xf32>
    %561 = vector.broadcast %558 : f32 to vector<1x256xf32>
    %562 = arith.mulf %561, %560 : vector<1x256xf32>
    %563 = arith.addf %557, %562 : vector<1x256xf32>
    %c89 = arith.constant 89 : index
    %564 = memref.load %arg1[%c89] : memref<98xf32, #tpu.memory_space<smem>>
    %c1_252 = arith.constant 1 : index
    %c0_253 = arith.constant 0 : index
    %c162_254 = arith.constant 162 : index
    %565 = vector.load %arg5[%c1_252, %c0_253, %c162_254] : memref<2x1x512xf32, #tpu.memory_space<vmem>>, vector<1x1x256xf32>
    %566 = vector.shape_cast %565 : vector<1x1x256xf32> to vector<1x256xf32>
    %567 = vector.broadcast %564 : f32 to vector<1x256xf32>
    %568 = arith.mulf %567, %566 : vector<1x256xf32>
    %569 = arith.addf %563, %568 : vector<1x256xf32>
    %c96_255 = arith.constant 96 : index
    %570 = memref.load %arg1[%c96_255] : memref<98xf32, #tpu.memory_space<smem>>
    %c1_256 = arith.constant 1 : index
    %c0_257 = arith.constant 0 : index
    %c178_258 = arith.constant 178 : index
    %571 = vector.load %arg5[%c1_256, %c0_257, %c178_258] : memref<2x1x512xf32, #tpu.memory_space<vmem>>, vector<1x1x256xf32>
    %572 = vector.shape_cast %571 : vector<1x1x256xf32> to vector<1x256xf32>
    %573 = vector.broadcast %570 : f32 to vector<1x256xf32>
    %574 = arith.mulf %573, %572 : vector<1x256xf32>
    %575 = arith.addf %569, %574 : vector<1x256xf32>
    %c5_259 = arith.constant 5 : index
    %c0_260 = arith.constant 0 : index
    %576 = vector.load %arg2[%c5_259, %c0_260] : memref<7x256xf32, #tpu.memory_space<vmem>>, vector<1x256xf32>
    %577 = arith.mulf %576, %575 : vector<1x256xf32>
    %578 = arith.addf %490, %577 : vector<1x256xf32>
    %cst_261 = arith.constant 0.000000e+00 : f32
    %579 = vector.broadcast %cst_261 : f32 to vector<1x256xf32>
    %c6 = arith.constant 6 : index
    %580 = memref.load %arg1[%c6] : memref<98xf32, #tpu.memory_space<smem>>
    %c0_262 = arith.constant 0 : index
    %c0_263 = arith.constant 0 : index
    %c83 = arith.constant 83 : index
    %581 = vector.load %arg5[%c0_262, %c0_263, %c83] : memref<2x1x512xf32, #tpu.memory_space<vmem>>, vector<1x1x256xf32>
    %582 = vector.shape_cast %581 : vector<1x1x256xf32> to vector<1x256xf32>
    %583 = vector.broadcast %580 : f32 to vector<1x256xf32>
    %584 = arith.mulf %583, %582 : vector<1x256xf32>
    %585 = arith.addf %579, %584 : vector<1x256xf32>
    %c13 = arith.constant 13 : index
    %586 = memref.load %arg1[%c13] : memref<98xf32, #tpu.memory_space<smem>>
    %c0_264 = arith.constant 0 : index
    %c0_265 = arith.constant 0 : index
    %c99 = arith.constant 99 : index
    %587 = vector.load %arg5[%c0_264, %c0_265, %c99] : memref<2x1x512xf32, #tpu.memory_space<vmem>>, vector<1x1x256xf32>
    %588 = vector.shape_cast %587 : vector<1x1x256xf32> to vector<1x256xf32>
    %589 = vector.broadcast %586 : f32 to vector<1x256xf32>
    %590 = arith.mulf %589, %588 : vector<1x256xf32>
    %591 = arith.addf %585, %590 : vector<1x256xf32>
    %c20 = arith.constant 20 : index
    %592 = memref.load %arg1[%c20] : memref<98xf32, #tpu.memory_space<smem>>
    %c0_266 = arith.constant 0 : index
    %c0_267 = arith.constant 0 : index
    %c115 = arith.constant 115 : index
    %593 = vector.load %arg5[%c0_266, %c0_267, %c115] : memref<2x1x512xf32, #tpu.memory_space<vmem>>, vector<1x1x256xf32>
    %594 = vector.shape_cast %593 : vector<1x1x256xf32> to vector<1x256xf32>
    %595 = vector.broadcast %592 : f32 to vector<1x256xf32>
    %596 = arith.mulf %595, %594 : vector<1x256xf32>
    %597 = arith.addf %591, %596 : vector<1x256xf32>
    %c27 = arith.constant 27 : index
    %598 = memref.load %arg1[%c27] : memref<98xf32, #tpu.memory_space<smem>>
    %c0_268 = arith.constant 0 : index
    %c0_269 = arith.constant 0 : index
    %c131 = arith.constant 131 : index
    %599 = vector.load %arg5[%c0_268, %c0_269, %c131] : memref<2x1x512xf32, #tpu.memory_space<vmem>>, vector<1x1x256xf32>
    %600 = vector.shape_cast %599 : vector<1x1x256xf32> to vector<1x256xf32>
    %601 = vector.broadcast %598 : f32 to vector<1x256xf32>
    %602 = arith.mulf %601, %600 : vector<1x256xf32>
    %603 = arith.addf %597, %602 : vector<1x256xf32>
    %c34 = arith.constant 34 : index
    %604 = memref.load %arg1[%c34] : memref<98xf32, #tpu.memory_space<smem>>
    %c0_270 = arith.constant 0 : index
    %c0_271 = arith.constant 0 : index
    %c147 = arith.constant 147 : index
    %605 = vector.load %arg5[%c0_270, %c0_271, %c147] : memref<2x1x512xf32, #tpu.memory_space<vmem>>, vector<1x1x256xf32>
    %606 = vector.shape_cast %605 : vector<1x1x256xf32> to vector<1x256xf32>
    %607 = vector.broadcast %604 : f32 to vector<1x256xf32>
    %608 = arith.mulf %607, %606 : vector<1x256xf32>
    %609 = arith.addf %603, %608 : vector<1x256xf32>
    %c41 = arith.constant 41 : index
    %610 = memref.load %arg1[%c41] : memref<98xf32, #tpu.memory_space<smem>>
    %c0_272 = arith.constant 0 : index
    %c0_273 = arith.constant 0 : index
    %c163 = arith.constant 163 : index
    %611 = vector.load %arg5[%c0_272, %c0_273, %c163] : memref<2x1x512xf32, #tpu.memory_space<vmem>>, vector<1x1x256xf32>
    %612 = vector.shape_cast %611 : vector<1x1x256xf32> to vector<1x256xf32>
    %613 = vector.broadcast %610 : f32 to vector<1x256xf32>
    %614 = arith.mulf %613, %612 : vector<1x256xf32>
    %615 = arith.addf %609, %614 : vector<1x256xf32>
    %c48 = arith.constant 48 : index
    %616 = memref.load %arg1[%c48] : memref<98xf32, #tpu.memory_space<smem>>
    %c0_274 = arith.constant 0 : index
    %c0_275 = arith.constant 0 : index
    %c179 = arith.constant 179 : index
    %617 = vector.load %arg5[%c0_274, %c0_275, %c179] : memref<2x1x512xf32, #tpu.memory_space<vmem>>, vector<1x1x256xf32>
    %618 = vector.shape_cast %617 : vector<1x1x256xf32> to vector<1x256xf32>
    %619 = vector.broadcast %616 : f32 to vector<1x256xf32>
    %620 = arith.mulf %619, %618 : vector<1x256xf32>
    %621 = arith.addf %615, %620 : vector<1x256xf32>
    %c55 = arith.constant 55 : index
    %622 = memref.load %arg1[%c55] : memref<98xf32, #tpu.memory_space<smem>>
    %c1_276 = arith.constant 1 : index
    %c0_277 = arith.constant 0 : index
    %c83_278 = arith.constant 83 : index
    %623 = vector.load %arg5[%c1_276, %c0_277, %c83_278] : memref<2x1x512xf32, #tpu.memory_space<vmem>>, vector<1x1x256xf32>
    %624 = vector.shape_cast %623 : vector<1x1x256xf32> to vector<1x256xf32>
    %625 = vector.broadcast %622 : f32 to vector<1x256xf32>
    %626 = arith.mulf %625, %624 : vector<1x256xf32>
    %627 = arith.addf %621, %626 : vector<1x256xf32>
    %c62 = arith.constant 62 : index
    %628 = memref.load %arg1[%c62] : memref<98xf32, #tpu.memory_space<smem>>
    %c1_279 = arith.constant 1 : index
    %c0_280 = arith.constant 0 : index
    %c99_281 = arith.constant 99 : index
    %629 = vector.load %arg5[%c1_279, %c0_280, %c99_281] : memref<2x1x512xf32, #tpu.memory_space<vmem>>, vector<1x1x256xf32>
    %630 = vector.shape_cast %629 : vector<1x1x256xf32> to vector<1x256xf32>
    %631 = vector.broadcast %628 : f32 to vector<1x256xf32>
    %632 = arith.mulf %631, %630 : vector<1x256xf32>
    %633 = arith.addf %627, %632 : vector<1x256xf32>
    %c69 = arith.constant 69 : index
    %634 = memref.load %arg1[%c69] : memref<98xf32, #tpu.memory_space<smem>>
    %c1_282 = arith.constant 1 : index
    %c0_283 = arith.constant 0 : index
    %c115_284 = arith.constant 115 : index
    %635 = vector.load %arg5[%c1_282, %c0_283, %c115_284] : memref<2x1x512xf32, #tpu.memory_space<vmem>>, vector<1x1x256xf32>
    %636 = vector.shape_cast %635 : vector<1x1x256xf32> to vector<1x256xf32>
    %637 = vector.broadcast %634 : f32 to vector<1x256xf32>
    %638 = arith.mulf %637, %636 : vector<1x256xf32>
    %639 = arith.addf %633, %638 : vector<1x256xf32>
    %c76 = arith.constant 76 : index
    %640 = memref.load %arg1[%c76] : memref<98xf32, #tpu.memory_space<smem>>
    %c1_285 = arith.constant 1 : index
    %c0_286 = arith.constant 0 : index
    %c131_287 = arith.constant 131 : index
    %641 = vector.load %arg5[%c1_285, %c0_286, %c131_287] : memref<2x1x512xf32, #tpu.memory_space<vmem>>, vector<1x1x256xf32>
    %642 = vector.shape_cast %641 : vector<1x1x256xf32> to vector<1x256xf32>
    %643 = vector.broadcast %640 : f32 to vector<1x256xf32>
    %644 = arith.mulf %643, %642 : vector<1x256xf32>
    %645 = arith.addf %639, %644 : vector<1x256xf32>
    %c83_288 = arith.constant 83 : index
    %646 = memref.load %arg1[%c83_288] : memref<98xf32, #tpu.memory_space<smem>>
    %c1_289 = arith.constant 1 : index
    %c0_290 = arith.constant 0 : index
    %c147_291 = arith.constant 147 : index
    %647 = vector.load %arg5[%c1_289, %c0_290, %c147_291] : memref<2x1x512xf32, #tpu.memory_space<vmem>>, vector<1x1x256xf32>
    %648 = vector.shape_cast %647 : vector<1x1x256xf32> to vector<1x256xf32>
    %649 = vector.broadcast %646 : f32 to vector<1x256xf32>
    %650 = arith.mulf %649, %648 : vector<1x256xf32>
    %651 = arith.addf %645, %650 : vector<1x256xf32>
    %c90 = arith.constant 90 : index
    %652 = memref.load %arg1[%c90] : memref<98xf32, #tpu.memory_space<smem>>
    %c1_292 = arith.constant 1 : index
    %c0_293 = arith.constant 0 : index
    %c163_294 = arith.constant 163 : index
    %653 = vector.load %arg5[%c1_292, %c0_293, %c163_294] : memref<2x1x512xf32, #tpu.memory_space<vmem>>, vector<1x1x256xf32>
    %654 = vector.shape_cast %653 : vector<1x1x256xf32> to vector<1x256xf32>
    %655 = vector.broadcast %652 : f32 to vector<1x256xf32>
    %656 = arith.mulf %655, %654 : vector<1x256xf32>
    %657 = arith.addf %651, %656 : vector<1x256xf32>
    %c97_295 = arith.constant 97 : index
    %658 = memref.load %arg1[%c97_295] : memref<98xf32, #tpu.memory_space<smem>>
    %c1_296 = arith.constant 1 : index
    %c0_297 = arith.constant 0 : index
    %c179_298 = arith.constant 179 : index
    %659 = vector.load %arg5[%c1_296, %c0_297, %c179_298] : memref<2x1x512xf32, #tpu.memory_space<vmem>>, vector<1x1x256xf32>
    %660 = vector.shape_cast %659 : vector<1x1x256xf32> to vector<1x256xf32>
    %661 = vector.broadcast %658 : f32 to vector<1x256xf32>
    %662 = arith.mulf %661, %660 : vector<1x256xf32>
    %663 = arith.addf %657, %662 : vector<1x256xf32>
    %c6_299 = arith.constant 6 : index
    %c0_300 = arith.constant 0 : index
    %664 = vector.load %arg2[%c6_299, %c0_300] : memref<7x256xf32, #tpu.memory_space<vmem>>, vector<1x256xf32>
    %665 = arith.mulf %664, %663 : vector<1x256xf32>
    %666 = arith.addf %578, %665 : vector<1x256xf32>
    %667 = arith.negf %666 : vector<1x256xf32>
    %668 = math.exp %667 : vector<1x256xf32>
    %cst_301 = arith.constant 1.000000e+00 : f32
    %669 = vector.broadcast %cst_301 : f32 to vector<1x256xf32>
    %670 = arith.addf %669, %668 : vector<1x256xf32>
    %671 = arith.divf %669, %670 : vector<1x256xf32>
    %c0_302 = arith.constant 0 : index
    %c0_303 = arith.constant 0 : index
    %c0_304 = arith.constant 0 : index
    %672 = vector.load %arg4[%c0_302, %c0_303, %c0_304] : memref<1x1x256xf32, #tpu.memory_space<vmem>>, vector<1x1x256xf32>
    %673 = vector.shape_cast %672 : vector<1x1x256xf32> to vector<1x256xf32>
    %674 = vector.shape_cast %671 : vector<1x256xf32> to vector<1x1x256xf32>
    tpu.vector_store %arg4[%c0_302, %c0_303, %c0_304], %674 {strides = array<i32>} : memref<1x1x256xf32, #tpu.memory_space<vmem>>, vector<1x1x256xf32>,
    return
  }
  func.func @transform_0(%arg0: i32) -> i32 {
    %c0_i32 = arith.constant 0 : i32
    %c0_i32_0 = arith.constant 0 : i32
    return %c0_i32 : i32
  }
  func.func @transform_1(%arg0: i32) -> (i32, i32) {
    %c0_i32 = arith.constant 0 : i32
    %c0_i32_0 = arith.constant 0 : i32
    %c0_i32_1 = arith.constant 0 : i32
    return %c0_i32, %c0_i32_0 : i32, i32
  }
  func.func @transform_2(%arg0: i32) -> (i32, i32, i32) {
    %c0_i32 = arith.constant 0 : i32
    %c0_i32_0 = arith.constant 0 : i32
    %c0_i32_1 = arith.constant 0 : i32
    return %arg0, %c0_i32, %c0_i32_0 : i32, i32, i32
  }
  func.func @transform_3(%arg0: i32) -> (i32, i32, i32) {
    %c0_i32 = arith.constant 0 : i32
    %c0_i32_0 = arith.constant 0 : i32
    %c0_i32_1 = arith.constant 0 : i32
    return %arg0, %c0_i32, %c0_i32_0 : i32, i32, i32
  }
}

</mosaic_0001>

<llo_original>
// kernel: tpu_custom_call.1
$region0: #{tpu_custom_call.1}
  #allocation0 [shape = 'u32[]', space=smem, size = 0x4, offset = 0x4, fixed_abs, tag = 'smem constant byte address 0x4 - core index']
  #allocation1 [shape = 'u32[72,128]{1,0:T(1,128)}', space=vmem, size = 0x9000, scoped, tag = 'internal scratch']
  #allocation2 [shape = 'f32[2,1,512]{2,1,0:T(1,128)}', space=vmem, size = 0x1000, scoped, tag = 'scratch operand']
  %s0 = inlined_call_operand.hbm [shape: f32[98], index: 0, kind: input, shape index: {}]
  %s1 = inlined_call_operand.hbm [shape: f32[7,256], index: 1, kind: input, shape index: {}]
  %s2 = inlined_call_operand.hbm [shape: f32[2,32,256], index: 2, kind: input, shape index: {}]
  %s3 = inlined_call_operand.hbm [shape: f32[2,1,256], index: 3, kind: output, shape index: {}]
  %s4 = sld [smem:[#allocation0]]
  $region57: #{tpu_custom_call.1} parent=0
    _
  %s6 = ssub.s32 1, %s4
  %s7 = scalar_select 0, %s6, %s4
  $region1: #{tpu_custom_call.1} parent=0
    #allocation3 [shape = 'u8[512]{0}', space=smem, size = 0x200, scoped, tag = 'input window, operand 0, single buffered']
    #allocation4 [shape = 's32[2]{0}', space=sflag, size = 0x8, scoped, tag = 'scoped memory for tpu_custom_call.1']
    #allocation5 [shape = 's32[2]{0}', space=sflag, size = 0x8, scoped, tag = 'scoped memory for tpu_custom_call.1']
    #allocation6 [shape = 's32[2]{0}', space=sflag, size = 0x8, scoped, tag = 'scoped memory for tpu_custom_call.1']
    #allocation7 [shape = 'u8[8192]{0}', space=vmem, size = 0x2000, scoped, tag = 'input window, operand 1, single buffered']
    #allocation8 [shape = 'u8[65536]{0}', space=vmem, size = 0x10000, scoped, tag = 'input window, operand 2']
    #allocation9 [shape = 's32[2]{0}', space=sflag, size = 0x8, scoped, tag = 'scoped memory for tpu_custom_call.1']
    #allocation10 [shape = 'u8[2048]{0}', space=vmem, size = 0x800, scoped, tag = 'output window, operand 0']
    %8 = vsyncpa [#allocation6], 0
    %9 = vsyncpa [#allocation4], 0
    %10 = vsyncpa [#allocation9], 0
    %s11 = scalar_lea.sflag [#allocation9], 1
    %12 = vsyncpa %s11, 0
    %13 = vsyncpa [#allocation5], 0
    %s14 = scalar_lea.sflag [#allocation5], 1
    %15 = vsyncpa %s14, 0
    loop: start=0, step=1, limit=4
    $region2: #{tpu_custom_call.1} parent=1 // loop_pre_header
      _
    $region3: #{tpu_custom_call.1} parent=1 // loop_header
      %s17 = sphi 0, %s21
      %p18 = scmp.ge.s32.totalorder %s17, 4
      %s25 = sphi 0, %s25
      %s27 = sphi 0, %s25
      %s28 = sphi 0, %s27
      %s42 = sphi 0, %s28
      %s46 = sphi 0, %s46
      %s48 = sphi 0, %s46
      %s49 = sphi 0, %s48
      %s63 = sphi 0, %s49
      %s69 = sphi 0, %s71
      %s72 = sphi 0, %s69
      %s73 = sphi 0, %s72
      %s89 = sphi 0, %s73
      %s95 = sphi 0, %s97
      %s98 = sphi 0, %s95
      %s99 = sphi 0, %s98
      %s115 = sphi 0, %s99
    $region4: #{tpu_custom_call.1} parent=1 // loop_header_branch
      %20 = sbr.rel (%p18) target = $region8
    $region5: #{tpu_custom_call.1} parent=1 // loop_body
      %s22 = ssub.s32 %s17, 1
      %s23 = ssub.s32 %s17, 2
      %s24 = sadd.s32 %s17, 1
      %s26 = sadd.s32 %s25, 1
      %p29 = scmp.eq.s32.totalorder %s17, 1
      %p30 = scmp.ne.s32.totalorder %s25, %s27
      %p31 = scmp.eq.s32.totalorder %s17, 0
      %p32 = por %p30, %p31
      %p33 = scmp.ne.s32.totalorder %s25, %s27
      %p34 = scmp.eq.s32.totalorder %s22, 1
      %p35 = por %p33, %p34
      %p36 = scmp.ne.s32.totalorder %s27, %s28
      %p37 = scmp.eq.s32.totalorder %s22, 0
      %p38 = por %p36, %p37
      %p39 = scmp.ne.s32.totalorder %s27, %s28
      %p40 = scmp.eq.s32.totalorder %s23, 1
      %p41 = por %p39, %p40
      %p43 = scmp.ne.s32.totalorder %s28, %s42
      %p44 = scmp.eq.s32.totalorder %s23, 0
      %p45 = por %p43, %p44
      %s47 = sadd.s32 %s46, 1
      %p50 = scmp.eq.s32.totalorder %s17, 1
      %p51 = scmp.ne.s32.totalorder %s46, %s48
      %p52 = scmp.eq.s32.totalorder %s17, 0
      %p53 = por %p51, %p52
      %p54 = scmp.ne.s32.totalorder %s46, %s48
      %p55 = scmp.eq.s32.totalorder %s22, 1
      %p56 = por %p54, %p55
      %p57 = scmp.ne.s32.totalorder %s48, %s49
      %p58 = scmp.eq.s32.totalorder %s22, 0
      %p59 = por %p57, %p58
      %p60 = scmp.ne.s32.totalorder %s48, %s49
      %p61 = scmp.eq.s32.totalorder %s23, 1
      %p62 = por %p60, %p61
      %p64 = scmp.ne.s32.totalorder %s49, %s63
      %p65 = scmp.eq.s32.totalorder %s23, 0
      %p66 = por %p64, %p65
      %s67 = ssub.s32 %s17, %s24
      %p68 = scmp.eq.s32.totalorder %s67, 0
      %s70 = sadd.s32 %s69, 1
      %s71 = scalar_select %p68, %s69, %s70
      %p74 = pneg %p68
      %p75 = scmp.eq.s32.totalorder %s17, 1
      %p76 = por %p74, %p75
      %p77 = scmp.ne.s32.totalorder %s69, %s72
      %p78 = scmp.eq.s32.totalorder %s17, 0
      %p79 = por %p77, %p78
      %p80 = scmp.ne.s32.totalorder %s69, %s72
      %p81 = scmp.eq.s32.totalorder %s22, 1
      %p82 = por %p80, %p81
      %p83 = scmp.ne.s32.totalorder %s72, %s73
      %p84 = scmp.eq.s32.totalorder %s22, 0
      %p85 = por %p83, %p84
      %p86 = scmp.ne.s32.totalorder %s72, %s73
      %p87 = scmp.eq.s32.totalorder %s23, 1
      %p88 = por %p86, %p87
      %p90 = scmp.ne.s32.totalorder %s73, %s89
      %p91 = scmp.eq.s32.totalorder %s23, 0
      %p92 = por %p90, %p91
      %s93 = ssub.s32 %s17, %s24
      %p94 = scmp.eq.s32.totalorder %s93, 0
      %s96 = sadd.s32 %s95, 1
      %s97 = scalar_select %p94, %s95, %s96
      %p100 = pneg %p94
      %p101 = scmp.eq.s32.totalorder %s17, 1
      %p102 = por %p100, %p101
      %p103 = scmp.ne.s32.totalorder %s95, %s98
      %p104 = scmp.eq.s32.totalorder %s17, 0
      %p105 = por %p103, %p104
      %p106 = scmp.ne.s32.totalorder %s95, %s98
      %p107 = scmp.eq.s32.totalorder %s22, 1
      %p108 = por %p106, %p107
      %p109 = scmp.ne.s32.totalorder %s98, %s99
      %p110 = scmp.eq.s32.totalorder %s22, 0
      %p111 = por %p109, %p110
      %p112 = scmp.ne.s32.totalorder %s98, %s99
      %p113 = scmp.eq.s32.totalorder %s23, 1
      %p114 = por %p112, %p113
      %p116 = scmp.ne.s32.totalorder %s99, %s115
      %p117 = scmp.eq.s32.totalorder %s23, 0
      %p118 = por %p116, %p117
      %p119 = scmp.le.s32.totalorder 1, %s17
      %p120 = scmp.lt.s32.totalorder %s17, 3
      %p121 = pnand %p119, %p120
      %p122 = pneg %p121
      // Predicated region
      $region9: #{tpu_custom_call.1} parent=5 // pred_check
        _
      $region10: #{tpu_custom_call.1} parent=5 // pred_check_branch
        %124 = sbr.rel (%p121) target = $region12
      $region11: #{tpu_custom_call.1} parent=5 // pred_region
        %s125 = ssub.s32 %s17, 1
        // Predicated region
        $region13: #{tpu_custom_call.1} parent=11 // pred_check
          %p126 = pneg %p38
        $region14: #{tpu_custom_call.1} parent=11 // pred_check_branch
          %128 = sbr.rel (%p126) target = $region16
        $region15: #{tpu_custom_call.1} parent=11 // pred_region
          %130 = vsyncadd [#allocation6], 0
          %s132 = sshll.u32 %s0, 4
          %s133 = int_to_ptr.hbm [resolvable:$true] %s132
          %135 = dma.hbm_to_smem %s133, 16, [#allocation3], [#allocation6]
        $region16: #{tpu_custom_call.1} parent=11 // pred_fallthru
          _
        // Predicated region
        $region17: #{tpu_custom_call.1} parent=11 // pred_check
          %p136 = pneg %p59
        $region18: #{tpu_custom_call.1} parent=11 // pred_check_branch
          %138 = sbr.rel (%p136) target = $region20
        $region19: #{tpu_custom_call.1} parent=11 // pred_region
          %140 = vsyncadd [#allocation4], 0
          %s142 = sshll.u32 %s1, 4
          %s143 = int_to_ptr.hbm [resolvable:$true] %s142
          %s144 = sshll.u32 [#allocation7], 4
          %s145 = int_to_ptr.vmem [resolvable:$true] %s144
          %147 = dma.hbm_to_vmem [thread:$0]  %s143, 256, %s145, [#allocation4]
        $region20: #{tpu_custom_call.1} parent=11 // pred_fallthru
          _
      $region12: #{tpu_custom_call.1} parent=5 // pred_fallthru
        _
      %p148 = scmp.lt.s32.totalorder %s17, 2
      // Predicated region
      $region21: #{tpu_custom_call.1} parent=5 // pred_check
        %p149 = pneg %p148
      $region22: #{tpu_custom_call.1} parent=5 // pred_check_branch
        %151 = sbr.rel (%p149) target = $region24
      $region23: #{tpu_custom_call.1} parent=5 // pred_region
        // Predicated region
        $region25: #{tpu_custom_call.1} parent=23 // pred_check
          %p152 = pneg %p79
        $region26: #{tpu_custom_call.1} parent=23 // pred_check_branch
          %154 = sbr.rel (%p152) target = $region28
        $region27: #{tpu_custom_call.1} parent=23 // pred_region
          %s155 = sand.u32 %s69, 1
          %s156 = scalar_lea.sflag [#allocation9], %s155
          %s157 = sand.u32 %s69, 1
          %s158 = smul.addr %s157, 64
          %s159 = scalar_lea.vmem [#allocation8], %s158
          %161 = vsyncadd %s156, 0
          %s162 = smul.addr %s17, 8
          %s163 = smul.addr %s162, 8
          %s164 = scalar_lea.hbm %s2, %s163
          %s165 = sshll.u32 %s164, 4
          %s166 = int_to_ptr.hbm [resolvable:$true] %s165
          %s167 = sshll.u32 %s159, 4
          %s168 = int_to_ptr.vmem [resolvable:$true] %s167
          %173 = dma.hbm_to_vmem [thread:$0]  %s166, 1024, %s168, %s156, 256, 256, 16
        $region28: #{tpu_custom_call.1} parent=23 // pred_fallthru
          _
      $region24: #{tpu_custom_call.1} parent=5 // pred_fallthru
        _
      %p174 = scmp.le.s32.totalorder 1, %s17
      %p175 = scmp.lt.s32.totalorder %s17, 3
      %p176 = pnand %p174, %p175
      %p177 = pneg %p176
      // Predicated region
      $region29: #{tpu_custom_call.1} parent=5 // pred_check
        _
      $region30: #{tpu_custom_call.1} parent=5 // pred_check_branch
        %179 = sbr.rel (%p176) target = $region32
      $region31: #{tpu_custom_call.1} parent=5 // pred_region
        %s180 = ssub.s32 %s17, 1
        // Predicated region
        $region33: #{tpu_custom_call.1} parent=31 // pred_check
          %p181 = pneg %p38
        $region34: #{tpu_custom_call.1} parent=31 // pred_check_branch
          %183 = sbr.rel (%p181) target = $region36
        $region35: #{tpu_custom_call.1} parent=31 // pred_region
          %185 = dma.done [#allocation6], 16
        $region36: #{tpu_custom_call.1} parent=31 // pred_fallthru
          _
        // Predicated region
        $region37: #{tpu_custom_call.1} parent=31 // pred_check
          %p186 = pneg %p59
        $region38: #{tpu_custom_call.1} parent=31 // pred_check_branch
          %188 = sbr.rel (%p186) target = $region40
        $region39: #{tpu_custom_call.1} parent=31 // pred_region
          %190 = dma.done [#allocation4], 256
        $region40: #{tpu_custom_call.1} parent=31 // pred_fallthru
          _
        %s191 = sand.u32 %s72, 1
        %s192 = scalar_lea.sflag [#allocation9], %s191
        %s193 = sand.u32 %s72, 1
        %s194 = smul.addr %s193, 64
        %s195 = scalar_lea.vmem [#allocation8], %s194
        // Predicated region
        $region41: #{tpu_custom_call.1} parent=31 // pred_check
          %p196 = pneg %p85
        $region42: #{tpu_custom_call.1} parent=31 // pred_check_branch
          %198 = sbr.rel (%p196) target = $region44
        $region43: #{tpu_custom_call.1} parent=31 // pred_region
          %200 = dma.done %s192, 1024
        $region44: #{tpu_custom_call.1} parent=31 // pred_fallthru
          _
        %201 = sfence
        %p202 = pneg %p38
        %p203 = pneg %p35
        %p204 = pneg %p59
        %p205 = pneg %p56
        %s206 = sand.u32 %s72, 1
        %s207 = scalar_lea.sflag [#allocation9], %s206
        %s208 = sand.u32 %s72, 1
        %s209 = smul.addr %s208, 64
        %s210 = scalar_lea.vmem [#allocation8], %s209
        %p211 = pneg %p85
        %p212 = pneg %p82
        %p213 = pneg %p111
        %p214 = pneg %p108
        %s215 = sand.u32 %s98, 1
        %s216 = scalar_lea.sflag [#allocation5], %s215
        %s217 = sand.u32 %s98, 1
        %s218 = smul.addr %s217, 2
        %s219 = scalar_lea.vmem [#allocation10], %s218
        %v220 = vlaneseq
        %vm221 = vcmp.ge.s32.totalorder %v220, 0
        %vm222 = vcmp.lt.s32.totalorder %v220, 512
        %vm223 = vmand %vm221, %vm222
        %224 = vst.msk [vmem:[#allocation2] sm:$0xf] %vm223, 0.0
        %225 = vst.msk [vmem:[#allocation2 + $0x4] sm:$0xf] %vm223, 0.0
        %s226 = smul.u32 0, 2
        %s227 = smul.addr %s226, 8
        %s228 = scalar_lea.vmem %s195, %s227 [#allocation8]
        %v229 = vld [vmem:[%s228] sm:$0xff]
        %v230 = vld [vmem:[%s228 + $0x8] sm:$0xff]
        %v231 = vadd.f32 %v229, 0.0
        %v232 = vadd.f32 %v230, 0.0
        %s233 = smul.u32 1, 2
        %s234 = smul.addr %s233, 8
        %s235 = scalar_lea.vmem %s195, %s234 [#allocation8]
        %v236 = vld [vmem:[%s235] sm:$0xff]
        %v237 = vld [vmem:[%s235 + $0x8] sm:$0xff]
        %v238 = vadd.f32 %v231, %v236
        %v239 = vadd.f32 %v232, %v237
        %v240 = vmax.f32 %v229, %v236
        %v241 = vmax.f32 %v230, %v237
        %s242 = smul.u32 2, 2
        %s243 = smul.addr %s242, 8
        %s244 = scalar_lea.vmem %s195, %s243 [#allocation8]
        %v245 = vld [vmem:[%s244] sm:$0xff]
        %v246 = vld [vmem:[%s244 + $0x8] sm:$0xff]
        %v247 = vadd.f32 %v238, %v245
        %v248 = vadd.f32 %v239, %v246
        %v249 = vmax.f32 %v240, %v245
        %v250 = vmax.f32 %v241, %v246
        %s251 = smul.u32 3, 2
        %s252 = smul.addr %s251, 8
        %s253 = scalar_lea.vmem %s195, %s252 [#allocation8]
        %v254 = vld [vmem:[%s253] sm:$0xff]
        %v255 = vld [vmem:[%s253 + $0x8] sm:$0xff]
        %v256 = vadd.f32 %v247, %v254
        %v257 = vadd.f32 %v248, %v255
        %v258 = vmax.f32 %v249, %v254
        %v259 = vmax.f32 %v250, %v255
        %v260 = vrot.slane %v256, 4
        %v261 = vadd.f32 %v256, %v260
        %v262 = vrot.slane %v261, 2
        %v263 = vadd.f32 %v261, %v262
        %v264 = vrot.slane %v263, 1
        %v265 = vadd.f32 %v263, %v264
        %v266 = vrot.slane %v257, 4
        %v267 = vadd.f32 %v257, %v266
        %v268 = vrot.slane %v267, 2
        %v269 = vadd.f32 %v267, %v268
        %v270 = vrot.slane %v269, 1
        %v271 = vadd.f32 %v269, %v270
        %v274 = vrot.slane %v271, 7
        %vm275 = vcmask 1040384
        %v276 = vsel %vm275, %v265, %v274
        %vm278 = vcmp.lt.s32.totalorder %v220, 256
        %vm279 = vmand %vm221, %vm278
        %280 = vst.msk [vmem:[#allocation2 + $0x1] sm:$0x3] %vm279, %v276
        %v281 = vrot.slane %v258, 4
        %v282 = vmax.f32 %v258, %v281
        %v283 = vrot.slane %v282, 2
        %v284 = vmax.f32 %v282, %v283
        %v285 = vrot.slane %v284, 1
        %v286 = vmax.f32 %v284, %v285
        %v287 = vrot.slane %v259, 4
        %v288 = vmax.f32 %v259, %v287
        %v289 = vrot.slane %v288, 2
        %v290 = vmax.f32 %v288, %v289
        %v291 = vrot.slane %v290, 1
        %v292 = vmax.f32 %v290, %v291
        %v295 = vrot.slane %v292, 7
        %v296 = vsel %vm275, %v286, %v295
        %s298 = scalar_lea.vmem [#allocation2], 4
        %299 = vst.msk [vmem:[%s298 + $0x1] sm:$0x3] %vm279, %v296
        %s300 = sld [smem:[#allocation3]]
        %v301 = vld [vmem:[#allocation2] sm:$0x7]
        %v302 = vstv %s300
        %v303 = vmul.f32 %v302, %v301
        %v304 = vadd.f32 %v303, 0.0
        %s305 = sld [smem:[#allocation3 + $0x7]]
        %v306 = vstv %s305
        %v307 = vmul.f32 %v306, %v301
        %309 = vrot.lane.b32.xlu0 %v307, 112
        %v310 = vpop.permute.xlu0 %309
        %v311 = vrot.slane %v310, 1
        %vm312 = vcmask 916480
        %v313 = vsel %vm312, %v310, %v311
        %v315 = vadd.f32 %v304, %v313
        %s316 = sld [smem:[#allocation3 + $0xe]]
        %v317 = vstv %s316
        %v318 = vmul.f32 %v317, %v301
        %320 = vrot.lane.b32.xlu0 %v318, 96
        %v321 = vpop.permute.xlu0 %320
        %v322 = vrot.slane %v321, 1
        %vm323 = vcmask 785408
        %v324 = vsel %vm323, %v321, %v322
        %v326 = vadd.f32 %v315, %v324
        %s327 = sld [smem:[#allocation3 + $0x15]]
        %v328 = vstv %s327
        %v329 = vmul.f32 %v328, %v301
        %331 = vrot.lane.b32.xlu0 %v329, 80
        %v332 = vpop.permute.xlu0 %331
        %v333 = vrot.slane %v332, 1
        %vm334 = vcmask 654336
        %v335 = vsel %vm334, %v332, %v333
        %v337 = vadd.f32 %v326, %v335
        %s338 = sld [smem:[#allocation3 + $0x1c]]
        %v339 = vld [vmem:[#allocation2 + $0x1] sm:$0x7]
        %v340 = vstv %s338
        %v341 = vmul.f32 %v340, %v339
        %343 = vrot.lane.b32.xlu0 %v341, 64
        %v344 = vpop.permute.xlu0 %343
        %v345 = vrot.slane %v344, 7
        %vm346 = vcmask 523264
        %v347 = vsel %vm346, %v345, %v344
        %v349 = vadd.f32 %v337, %v347
        %s350 = sld [smem:[#allocation3 + $0x23]]
        %v351 = vstv %s350
        %v352 = vmul.f32 %v351, %v339
        %354 = vrot.lane.b32.xlu0 %v352, 48
        %v355 = vpop.permute.xlu0 %354
        %v356 = vrot.slane %v355, 7
        %vm357 = vcmask 392192
        %v358 = vsel %vm357, %v356, %v355
        %v360 = vadd.f32 %v349, %v358
        %s361 = sld [smem:[#allocation3 + $0x2a]]
        %v362 = vstv %s361
        %v363 = vmul.f32 %v362, %v339
        %365 = vrot.lane.b32.xlu0 %v363, 32
        %v366 = vpop.permute.xlu0 %365
        %v367 = vrot.slane %v366, 7
        %vm368 = vcmask 261120
        %v369 = vsel %vm368, %v367, %v366
        %v371 = vadd.f32 %v360, %v369
        %s372 = sld [smem:[#allocation3 + $0x31]]
        %v373 = vld [vmem:[%s298] sm:$0x7]
        %v374 = vstv %s372
        %v375 = vmul.f32 %v374, %v373
        %v376 = vadd.f32 %v371, %v375
        %s377 = sld [smem:[#allocation3 + $0x38]]
        %v378 = vstv %s377
        %v379 = vmul.f32 %v378, %v373
        %381 = vrot.lane.b32.xlu0 %v379, 112
        %v382 = vpop.permute.xlu0 %381
        %v383 = vrot.slane %v382, 1
        %v384 = vsel %vm312, %v382, %v383
        %v386 = vadd.f32 %v376, %v384
        %s387 = sld [smem:[#allocation3 + $0x3f]]
        %v388 = vstv %s387
        %v389 = vmul.f32 %v388, %v373
        %391 = vrot.lane.b32.xlu0 %v389, 96
        %v392 = vpop.permute.xlu0 %391
        %v393 = vrot.slane %v392, 1
        %v394 = vsel %vm323, %v392, %v393
        %v396 = vadd.f32 %v386, %v394
        %s397 = sld [smem:[#allocation3 + $0x46]]
        %v398 = vstv %s397
        %v399 = vmul.f32 %v398, %v373
        %401 = vrot.lane.b32.xlu0 %v399, 80
        %v402 = vpop.permute.xlu0 %401
        %v403 = vrot.slane %v402, 1
        %v404 = vsel %vm334, %v402, %v403
        %v406 = vadd.f32 %v396, %v404
        %s407 = sld [smem:[#allocation3 + $0x4d]]
        %v408 = vld [vmem:[%s298 + $0x1] sm:$0x7]
        %v409 = vstv %s407
        %v410 = vmul.f32 %v409, %v408
        %412 = vrot.lane.b32.xlu0 %v410, 64
        %v413 = vpop.permute.xlu0 %412
        %v414 = vrot.slane %v413, 7
        %v415 = vsel %vm346, %v414, %v413
        %v417 = vadd.f32 %v406, %v415
        %s418 = sld [smem:[#allocation3 + $0x54]]
        %v419 = vstv %s418
        %v420 = vmul.f32 %v419, %v408
        %422 = vrot.lane.b32.xlu0 %v420, 48
        %v423 = vpop.permute.xlu0 %422
        %v424 = vrot.slane %v423, 7
        %v425 = vsel %vm357, %v424, %v423
        %v427 = vadd.f32 %v417, %v425
        %s428 = sld [smem:[#allocation3 + $0x5b]]
        %v429 = vstv %s428
        %v430 = vmul.f32 %v429, %v408
        %432 = vrot.lane.b32.xlu0 %v430, 32
        %v433 = vpop.permute.xlu0 %432
        %v434 = vrot.slane %v433, 7
        %v435 = vsel %vm368, %v434, %v433
        %v437 = vadd.f32 %v427, %v435
        %v438 = vld [vmem:[#allocation7] ss:$8 sm:$0x3]
        %440 = vrot.lane.b32.xlu0 %v437, 51
        %v441 = vpop.permute.xlu0 %440
        %v442 = vrot.slane %v441, 1
        %vm443 = vcmask 416768
        %v444 = vsel %vm443, %v441, %v442
        %v446 = vmul.f32 %v438, %v444
        %v447 = vadd.f32 %v446, 0.0
        %s448 = sld [smem:[#allocation3 + $0x1]]
        %v449 = vstv %s448
        %v450 = vmul.f32 %v449, %v301
        %v451 = vadd.f32 %v450, 0.0
        %s452 = sld [smem:[#allocation3 + $0x8]]
        %v453 = vstv %s452
        %v454 = vmul.f32 %v453, %v301
        %456 = vrot.lane.b32.xlu0 %v454, 112
        %v457 = vpop.permute.xlu0 %456
        %v458 = vrot.slane %v457, 1
        %v459 = vsel %vm312, %v457, %v458
        %v461 = vadd.f32 %v451, %v459
        %s462 = sld [smem:[#allocation3 + $0xf]]
        %v463 = vstv %s462
        %v464 = vmul.f32 %v463, %v301
        %466 = vrot.lane.b32.xlu0 %v464, 96
        %v467 = vpop.permute.xlu0 %466
        %v468 = vrot.slane %v467, 1
        %v469 = vsel %vm323, %v467, %v468
        %v471 = vadd.f32 %v461, %v469
        %s472 = sld [smem:[#allocation3 + $0x16]]
        %v473 = vstv %s472
        %v474 = vmul.f32 %v473, %v301
        %476 = vrot.lane.b32.xlu0 %v474, 80
        %v477 = vpop.permute.xlu0 %476
        %v478 = vrot.slane %v477, 1
        %v479 = vsel %vm334, %v477, %v478
        %v481 = vadd.f32 %v471, %v479
        %s482 = sld [smem:[#allocation3 + $0x1d]]
        %v483 = vstv %s482
        %v484 = vmul.f32 %v483, %v339
        %486 = vrot.lane.b32.xlu0 %v484, 64
        %v487 = vpop.permute.xlu0 %486
        %v488 = vrot.slane %v487, 7
        %v489 = vsel %vm346, %v488, %v487
        %v491 = vadd.f32 %v481, %v489
        %s492 = sld [smem:[#allocation3 + $0x24]]
        %v493 = vstv %s492
        %v494 = vmul.f32 %v493, %v339
        %496 = vrot.lane.b32.xlu0 %v494, 48
        %v497 = vpop.permute.xlu0 %496
        %v498 = vrot.slane %v497, 7
        %v499 = vsel %vm357, %v498, %v497
        %v501 = vadd.f32 %v491, %v499
        %s502 = sld [smem:[#allocation3 + $0x2b]]
        %v503 = vstv %s502
        %v504 = vmul.f32 %v503, %v339
        %506 = vrot.lane.b32.xlu0 %v504, 32
        %v507 = vpop.permute.xlu0 %506
        %v508 = vrot.slane %v507, 7
        %v509 = vsel %vm368, %v508, %v507
        %v511 = vadd.f32 %v501, %v509
        %s512 = sld [smem:[#allocation3 + $0x32]]
        %v513 = vstv %s512
        %v514 = vmul.f32 %v513, %v373
        %v515 = vadd.f32 %v511, %v514
        %s516 = sld [smem:[#allocation3 + $0x39]]
        %v517 = vstv %s516
        %v518 = vmul.f32 %v517, %v373
        %520 = vrot.lane.b32.xlu0 %v518, 112
        %v521 = vpop.permute.xlu0 %520
        %v522 = vrot.slane %v521, 1
        %v523 = vsel %vm312, %v521, %v522
        %v525 = vadd.f32 %v515, %v523
        %s526 = sld [smem:[#allocation3 + $0x40]]
        %v527 = vstv %s526
        %v528 = vmul.f32 %v527, %v373
        %530 = vrot.lane.b32.xlu0 %v528, 96
        %v531 = vpop.permute.xlu0 %530
        %v532 = vrot.slane %v531, 1
        %v533 = vsel %vm323, %v531, %v532
        %v535 = vadd.f32 %v525, %v533
        %s536 = sld [smem:[#allocation3 + $0x47]]
        %v537 = vstv %s536
        %v538 = vmul.f32 %v537, %v373
        %540 = vrot.lane.b32.xlu0 %v538, 80
        %v541 = vpop.permute.xlu0 %540
        %v542 = vrot.slane %v541, 1
        %v543 = vsel %vm334, %v541, %v542
        %v545 = vadd.f32 %v535, %v543
        %s546 = sld [smem:[#allocation3 + $0x4e]]
        %v547 = vstv %s546
        %v548 = vmul.f32 %v547, %v408
        %550 = vrot.lane.b32.xlu0 %v548, 64
        %v551 = vpop.permute.xlu0 %550
        %v552 = vrot.slane %v551, 7
        %v553 = vsel %vm346, %v552, %v551
        %v555 = vadd.f32 %v545, %v553
        %s556 = sld [smem:[#allocation3 + $0x55]]
        %v557 = vstv %s556
        %v558 = vmul.f32 %v557, %v408
        %560 = vrot.lane.b32.xlu0 %v558, 48
        %v561 = vpop.permute.xlu0 %560
        %v562 = vrot.slane %v561, 7
        %v563 = vsel %vm357, %v562, %v561
        %v565 = vadd.f32 %v555, %v563
        %s566 = sld [smem:[#allocation3 + $0x5c]]
        %v567 = vstv %s566
        %v568 = vmul.f32 %v567, %v408
        %570 = vrot.lane.b32.xlu0 %v568, 32
        %v571 = vpop.permute.xlu0 %570
        %v572 = vrot.slane %v571, 7
        %v573 = vsel %vm368, %v572, %v571
        %v575 = vadd.f32 %v565, %v573
        %s576 = scalar_lea.vmem [#allocation7], 1
        %v577 = vld [vmem:[%s576] ss:$8 sm:$0x3]
        %579 = vrot.lane.b32.xlu0 %v575, 50
        %v580 = vpop.permute.xlu0 %579
        %v581 = vrot.slane %v580, 1
        %vm582 = vcmask 408576
        %v583 = vsel %vm582, %v580, %v581
        %v585 = vmul.f32 %v577, %v583
        %v586 = vadd.f32 %v447, %v585
        %s587 = sld [smem:[#allocation3 + $0x2]]
        %v588 = vstv %s587
        %v589 = vmul.f32 %v588, %v301
        %v590 = vadd.f32 %v589, 0.0
        %s591 = sld [smem:[#allocation3 + $0x9]]
        %v592 = vstv %s591
        %v593 = vmul.f32 %v592, %v301
        %595 = vrot.lane.b32.xlu0 %v593, 112
        %v596 = vpop.permute.xlu0 %595
        %v597 = vrot.slane %v596, 1
        %v598 = vsel %vm312, %v596, %v597
        %v600 = vadd.f32 %v590, %v598
        %s601 = sld [smem:[#allocation3 + $0x10]]
        %v602 = vstv %s601
        %v603 = vmul.f32 %v602, %v301
        %605 = vrot.lane.b32.xlu0 %v603, 96
        %v606 = vpop.permute.xlu0 %605
        %v607 = vrot.slane %v606, 1
        %v608 = vsel %vm323, %v606, %v607
        %v610 = vadd.f32 %v600, %v608
        %s611 = sld [smem:[#allocation3 + $0x17]]
        %v612 = vstv %s611
        %v613 = vmul.f32 %v612, %v301
        %615 = vrot.lane.b32.xlu0 %v613, 80
        %v616 = vpop.permute.xlu0 %615
        %v617 = vrot.slane %v616, 1
        %v618 = vsel %vm334, %v616, %v617
        %v620 = vadd.f32 %v610, %v618
        %s621 = sld [smem:[#allocation3 + $0x1e]]
        %v622 = vstv %s621
        %v623 = vmul.f32 %v622, %v339
        %625 = vrot.lane.b32.xlu0 %v623, 64
        %v626 = vpop.permute.xlu0 %625
        %v627 = vrot.slane %v626, 7
        %v628 = vsel %vm346, %v627, %v626
        %v630 = vadd.f32 %v620, %v628
        %s631 = sld [smem:[#allocation3 + $0x25]]
        %v632 = vstv %s631
        %v633 = vmul.f32 %v632, %v339
        %635 = vrot.lane.b32.xlu0 %v633, 48
        %v636 = vpop.permute.xlu0 %635
        %v637 = vrot.slane %v636, 7
        %v638 = vsel %vm357, %v637, %v636
        %v640 = vadd.f32 %v630, %v638
        %s641 = sld [smem:[#allocation3 + $0x2c]]
        %v642 = vstv %s641
        %v643 = vmul.f32 %v642, %v339
        %645 = vrot.lane.b32.xlu0 %v643, 32
        %v646 = vpop.permute.xlu0 %645
        %v647 = vrot.slane %v646, 7
        %v648 = vsel %vm368, %v647, %v646
        %v650 = vadd.f32 %v640, %v648
        %s651 = sld [smem:[#allocation3 + $0x33]]
        %v652 = vstv %s651
        %v653 = vmul.f32 %v652, %v373
        %v654 = vadd.f32 %v650, %v653
        %s655 = sld [smem:[#allocation3 + $0x3a]]
        %v656 = vstv %s655
        %v657 = vmul.f32 %v656, %v373
        %659 = vrot.lane.b32.xlu0 %v657, 112
        %v660 = vpop.permute.xlu0 %659
        %v661 = vrot.slane %v660, 1
        %v662 = vsel %vm312, %v660, %v661
        %v664 = vadd.f32 %v654, %v662
        %s665 = sld [smem:[#allocation3 + $0x41]]
        %v666 = vstv %s665
        %v667 = vmul.f32 %v666, %v373
        %669 = vrot.lane.b32.xlu0 %v667, 96
        %v670 = vpop.permute.xlu0 %669
        %v671 = vrot.slane %v670, 1
        %v672 = vsel %vm323, %v670, %v671
        %v674 = vadd.f32 %v664, %v672
        %s675 = sld [smem:[#allocation3 + $0x48]]
        %v676 = vstv %s675
        %v677 = vmul.f32 %v676, %v373
        %679 = vrot.lane.b32.xlu0 %v677, 80
        %v680 = vpop.permute.xlu0 %679
        %v681 = vrot.slane %v680, 1
        %v682 = vsel %vm334, %v680, %v681
        %v684 = vadd.f32 %v674, %v682
        %s685 = sld [smem:[#allocation3 + $0x4f]]
        %v686 = vstv %s685
        %v687 = vmul.f32 %v686, %v408
        %689 = vrot.lane.b32.xlu0 %v687, 64
        %v690 = vpop.permute.xlu0 %689
        %v691 = vrot.slane %v690, 7
        %v692 = vsel %vm346, %v691, %v690
        %v694 = vadd.f32 %v684, %v692
        %s695 = sld [smem:[#allocation3 + $0x56]]
        %v696 = vstv %s695
        %v697 = vmul.f32 %v696, %v408
        %699 = vrot.lane.b32.xlu0 %v697, 48
        %v700 = vpop.permute.xlu0 %699
        %v701 = vrot.slane %v700, 7
        %v702 = vsel %vm357, %v701, %v700
        %v704 = vadd.f32 %v694, %v702
        %s705 = sld [smem:[#allocation3 + $0x5d]]
        %v706 = vstv %s705
        %v707 = vmul.f32 %v706, %v408
        %709 = vrot.lane.b32.xlu0 %v707, 32
        %v710 = vpop.permute.xlu0 %709
        %v711 = vrot.slane %v710, 7
        %v712 = vsel %vm368, %v711, %v710
        %v714 = vadd.f32 %v704, %v712
        %s715 = scalar_lea.vmem [#allocation7], 2
        %v716 = vld [vmem:[%s715] ss:$8 sm:$0x3]
        %718 = vrot.lane.b32.xlu0 %v714, 49
        %v719 = vpop.permute.xlu0 %718
        %v720 = vrot.slane %v719, 1
        %vm721 = vcmask 400384
        %v722 = vsel %vm721, %v719, %v720
        %v724 = vmul.f32 %v716, %v722
        %v725 = vadd.f32 %v586, %v724
        %s726 = sld [smem:[#allocation3 + $0x3]]
        %v727 = vstv %s726
        %v728 = vmul.f32 %v727, %v301
        %v729 = vadd.f32 %v728, 0.0
        %s730 = sld [smem:[#allocation3 + $0xa]]
        %v731 = vstv %s730
        %v732 = vmul.f32 %v731, %v301
        %734 = vrot.lane.b32.xlu0 %v732, 112
        %v735 = vpop.permute.xlu0 %734
        %v736 = vrot.slane %v735, 1
        %v737 = vsel %vm312, %v735, %v736
        %v739 = vadd.f32 %v729, %v737
        %s740 = sld [smem:[#allocation3 + $0x11]]
        %v741 = vstv %s740
        %v742 = vmul.f32 %v741, %v301
        %744 = vrot.lane.b32.xlu0 %v742, 96
        %v745 = vpop.permute.xlu0 %744
        %v746 = vrot.slane %v745, 1
        %v747 = vsel %vm323, %v745, %v746
        %v749 = vadd.f32 %v739, %v747
        %s750 = sld [smem:[#allocation3 + $0x18]]
        %v751 = vld [vmem:[#allocation2 + $0x1] sm:$0x3]
        %v752 = vstv %s750
        %v753 = vmul.f32 %v752, %v751
        %755 = vrot.lane.b32.xlu0 %v753, 80
        %v756 = vpop.permute.xlu0 %755
        %v757 = vrot.slane %v756, 7
        %v758 = vsel %vm334, %v757, %v756
        %v760 = vadd.f32 %v749, %v758
        %s761 = sld [smem:[#allocation3 + $0x1f]]
        %v762 = vstv %s761
        %v763 = vmul.f32 %v762, %v339
        %765 = vrot.lane.b32.xlu0 %v763, 64
        %v766 = vpop.permute.xlu0 %765
        %v767 = vrot.slane %v766, 7
        %v768 = vsel %vm346, %v767, %v766
        %v770 = vadd.f32 %v760, %v768
        %s771 = sld [smem:[#allocation3 + $0x26]]
        %v772 = vstv %s771
        %v773 = vmul.f32 %v772, %v339
        %775 = vrot.lane.b32.xlu0 %v773, 48
        %v776 = vpop.permute.xlu0 %775
        %v777 = vrot.slane %v776, 7
        %v778 = vsel %vm357, %v777, %v776
        %v780 = vadd.f32 %v770, %v778
        %s781 = sld [smem:[#allocation3 + $0x2d]]
        %v782 = vstv %s781
        %v783 = vmul.f32 %v782, %v339
        %785 = vrot.lane.b32.xlu0 %v783, 32
        %v786 = vpop.permute.xlu0 %785
        %v787 = vrot.slane %v786, 7
        %v788 = vsel %vm368, %v787, %v786
        %v790 = vadd.f32 %v780, %v788
        %s791 = sld [smem:[#allocation3 + $0x34]]
        %v792 = vstv %s791
        %v793 = vmul.f32 %v792, %v373
        %v794 = vadd.f32 %v790, %v793
        %s795 = sld [smem:[#allocation3 + $0x3b]]
        %v796 = vstv %s795
        %v797 = vmul.f32 %v796, %v373
        %799 = vrot.lane.b32.xlu0 %v797, 112
        %v800 = vpop.permute.xlu0 %799
        %v801 = vrot.slane %v800, 1
        %v802 = vsel %vm312, %v800, %v801
        %v804 = vadd.f32 %v794, %v802
        %s805 = sld [smem:[#allocation3 + $0x42]]
        %v806 = vstv %s805
        %v807 = vmul.f32 %v806, %v373
        %809 = vrot.lane.b32.xlu0 %v807, 96
        %v810 = vpop.permute.xlu0 %809
        %v811 = vrot.slane %v810, 1
        %v812 = vsel %vm323, %v810, %v811
        %v814 = vadd.f32 %v804, %v812
        %s815 = sld [smem:[#allocation3 + $0x49]]
        %v816 = vld [vmem:[%s298 + $0x1] sm:$0x3]
        %v817 = vstv %s815
        %v818 = vmul.f32 %v817, %v816
        %820 = vrot.lane.b32.xlu0 %v818, 80
        %v821 = vpop.permute.xlu0 %820
        %v822 = vrot.slane %v821, 7
        %v823 = vsel %vm334, %v822, %v821
        %v825 = vadd.f32 %v814, %v823
        %s826 = sld [smem:[#allocation3 + $0x50]]
        %v827 = vstv %s826
        %v828 = vmul.f32 %v827, %v408
        %830 = vrot.lane.b32.xlu0 %v828, 64
        %v831 = vpop.permute.xlu0 %830
        %v832 = vrot.slane %v831, 7
        %v833 = vsel %vm346, %v832, %v831
        %v835 = vadd.f32 %v825, %v833
        %s836 = sld [smem:[#allocation3 + $0x57]]
        %v837 = vstv %s836
        %v838 = vmul.f32 %v837, %v408
        %840 = vrot.lane.b32.xlu0 %v838, 48
        %v841 = vpop.permute.xlu0 %840
        %v842 = vrot.slane %v841, 7
        %v843 = vsel %vm357, %v842, %v841
        %v845 = vadd.f32 %v835, %v843
        %s846 = sld [smem:[#allocation3 + $0x5e]]
        %v847 = vstv %s846
        %v848 = vmul.f32 %v847, %v408
        %850 = vrot.lane.b32.xlu0 %v848, 32
        %v851 = vpop.permute.xlu0 %850
        %v852 = vrot.slane %v851, 7
        %v853 = vsel %vm368, %v852, %v851
        %v855 = vadd.f32 %v845, %v853
        %s856 = scalar_lea.vmem [#allocation7], 3
        %v857 = vld [vmem:[%s856] ss:$8 sm:$0x3]
        %859 = vrot.lane.b32.xlu0 %v855, 48
        %v860 = vpop.permute.xlu0 %859
        %v861 = vrot.slane %v860, 1
        %v862 = vsel %vm357, %v860, %v861
        %v864 = vmul.f32 %v857, %v862
        %v865 = vadd.f32 %v725, %v864
        %s866 = sld [smem:[#allocation3 + $0x4]]
        %v867 = vstv %s866
        %v868 = vmul.f32 %v867, %v301
        %v869 = vadd.f32 %v868, 0.0
        %s870 = sld [smem:[#allocation3 + $0xb]]
        %v871 = vstv %s870
        %v872 = vmul.f32 %v871, %v301
        %874 = vrot.lane.b32.xlu0 %v872, 112
        %v875 = vpop.permute.xlu0 %874
        %v876 = vrot.slane %v875, 1
        %v877 = vsel %vm312, %v875, %v876
        %v879 = vadd.f32 %v869, %v877
        %s880 = sld [smem:[#allocation3 + $0x12]]
        %v881 = vstv %s880
        %v882 = vmul.f32 %v881, %v301
        %884 = vrot.lane.b32.xlu0 %v882, 96
        %v885 = vpop.permute.xlu0 %884
        %v886 = vrot.slane %v885, 1
        %v887 = vsel %vm323, %v885, %v886
        %v889 = vadd.f32 %v879, %v887
        %s890 = sld [smem:[#allocation3 + $0x19]]
        %v891 = vstv %s890
        %v892 = vmul.f32 %v891, %v339
        %894 = vrot.lane.b32.xlu0 %v892, 80
        %v895 = vpop.permute.xlu0 %894
        %v896 = vrot.slane %v895, 7
        %v897 = vsel %vm334, %v896, %v895
        %v899 = vadd.f32 %v889, %v897
        %s900 = sld [smem:[#allocation3 + $0x20]]
        %v901 = vstv %s900
        %v902 = vmul.f32 %v901, %v339
        %904 = vrot.lane.b32.xlu0 %v902, 64
        %v905 = vpop.permute.xlu0 %904
        %v906 = vrot.slane %v905, 7
        %v907 = vsel %vm346, %v906, %v905
        %v909 = vadd.f32 %v899, %v907
        %s910 = sld [smem:[#allocation3 + $0x27]]
        %v911 = vstv %s910
        %v912 = vmul.f32 %v911, %v339
        %914 = vrot.lane.b32.xlu0 %v912, 48
        %v915 = vpop.permute.xlu0 %914
        %v916 = vrot.slane %v915, 7
        %v917 = vsel %vm357, %v916, %v915
        %v919 = vadd.f32 %v909, %v917
        %s920 = sld [smem:[#allocation3 + $0x2e]]
        %v921 = vstv %s920
        %v922 = vmul.f32 %v921, %v339
        %924 = vrot.lane.b32.xlu0 %v922, 32
        %v925 = vpop.permute.xlu0 %924
        %v926 = vrot.slane %v925, 7
        %v927 = vsel %vm368, %v926, %v925
        %v929 = vadd.f32 %v919, %v927
        %s930 = sld [smem:[#allocation3 + $0x35]]
        %v931 = vstv %s930
        %v932 = vmul.f32 %v931, %v373
        %v933 = vadd.f32 %v929, %v932
        %s934 = sld [smem:[#allocation3 + $0x3c]]
        %v935 = vstv %s934
        %v936 = vmul.f32 %v935, %v373
        %938 = vrot.lane.b32.xlu0 %v936, 112
        %v939 = vpop.permute.xlu0 %938
        %v940 = vrot.slane %v939, 1
        %v941 = vsel %vm312, %v939, %v940
        %v943 = vadd.f32 %v933, %v941
        %s944 = sld [smem:[#allocation3 + $0x43]]
        %v945 = vstv %s944
        %v946 = vmul.f32 %v945, %v373
        %948 = vrot.lane.b32.xlu0 %v946, 96
        %v949 = vpop.permute.xlu0 %948
        %v950 = vrot.slane %v949, 1
        %v951 = vsel %vm323, %v949, %v950
        %v953 = vadd.f32 %v943, %v951
        %s954 = sld [smem:[#allocation3 + $0x4a]]
        %v955 = vstv %s954
        %v956 = vmul.f32 %v955, %v408
        %958 = vrot.lane.b32.xlu0 %v956, 80
        %v959 = vpop.permute.xlu0 %958
        %v960 = vrot.slane %v959, 7
        %v961 = vsel %vm334, %v960, %v959
        %v963 = vadd.f32 %v953, %v961
        %s964 = sld [smem:[#allocation3 + $0x51]]
        %v965 = vstv %s964
        %v966 = vmul.f32 %v965, %v408
        %968 = vrot.lane.b32.xlu0 %v966, 64
        %v969 = vpop.permute.xlu0 %968
        %v970 = vrot.slane %v969, 7
        %v971 = vsel %vm346, %v970, %v969
        %v973 = vadd.f32 %v963, %v971
        %s974 = sld [smem:[#allocation3 + $0x58]]
        %v975 = vstv %s974
        %v976 = vmul.f32 %v975, %v408
        %978 = vrot.lane.b32.xlu0 %v976, 48
        %v979 = vpop.permute.xlu0 %978
        %v980 = vrot.slane %v979, 7
        %v981 = vsel %vm357, %v980, %v979
        %v983 = vadd.f32 %v973, %v981
        %s984 = sld [smem:[#allocation3 + $0x5f]]
        %v985 = vstv %s984
        %v986 = vmul.f32 %v985, %v408
        %988 = vrot.lane.b32.xlu0 %v986, 32
        %v989 = vpop.permute.xlu0 %988
        %v990 = vrot.slane %v989, 7
        %v991 = vsel %vm368, %v990, %v989
        %v993 = vadd.f32 %v983, %v991
        %s994 = scalar_lea.vmem [#allocation7], 4
        %v995 = vld [vmem:[%s994] ss:$8 sm:$0x3]
        %997 = vrot.lane.b32.xlu0 %v993, 47
        %v998 = vpop.permute.xlu0 %997
        %v999 = vrot.slane %v998, 1
        %vm1000 = vcmask 384000
        %v1001 = vsel %vm1000, %v998, %v999
        %v1003 = vmul.f32 %v995, %v1001
        %v1004 = vadd.f32 %v865, %v1003
        %s1005 = sld [smem:[#allocation3 + $0x5]]
        %v1006 = vstv %s1005
        %v1007 = vmul.f32 %v1006, %v301
        %v1008 = vadd.f32 %v1007, 0.0
        %s1009 = sld [smem:[#allocation3 + $0xc]]
        %v1010 = vstv %s1009
        %v1011 = vmul.f32 %v1010, %v301
        %1013 = vrot.lane.b32.xlu0 %v1011, 112
        %v1014 = vpop.permute.xlu0 %1013
        %v1015 = vrot.slane %v1014, 1
        %v1016 = vsel %vm312, %v1014, %v1015
        %v1018 = vadd.f32 %v1008, %v1016
        %s1019 = sld [smem:[#allocation3 + $0x13]]
        %v1020 = vstv %s1019
        %v1021 = vmul.f32 %v1020, %v301
        %1023 = vrot.lane.b32.xlu0 %v1021, 96
        %v1024 = vpop.permute.xlu0 %1023
        %v1025 = vrot.slane %v1024, 1
        %v1026 = vsel %vm323, %v1024, %v1025
        %v1028 = vadd.f32 %v1018, %v1026
        %s1029 = sld [smem:[#allocation3 + $0x1a]]
        %v1030 = vstv %s1029
        %v1031 = vmul.f32 %v1030, %v339
        %1033 = vrot.lane.b32.xlu0 %v1031, 80
        %v1034 = vpop.permute.xlu0 %1033
        %v1035 = vrot.slane %v1034, 7
        %v1036 = vsel %vm334, %v1035, %v1034
        %v1038 = vadd.f32 %v1028, %v1036
        %s1039 = sld [smem:[#allocation3 + $0x21]]
        %v1040 = vstv %s1039
        %v1041 = vmul.f32 %v1040, %v339
        %1043 = vrot.lane.b32.xlu0 %v1041, 64
        %v1044 = vpop.permute.xlu0 %1043
        %v1045 = vrot.slane %v1044, 7
        %v1046 = vsel %vm346, %v1045, %v1044
        %v1048 = vadd.f32 %v1038, %v1046
        %s1049 = sld [smem:[#allocation3 + $0x28]]
        %v1050 = vstv %s1049
        %v1051 = vmul.f32 %v1050, %v339
        %1053 = vrot.lane.b32.xlu0 %v1051, 48
        %v1054 = vpop.permute.xlu0 %1053
        %v1055 = vrot.slane %v1054, 7
        %v1056 = vsel %vm357, %v1055, %v1054
        %v1058 = vadd.f32 %v1048, %v1056
        %s1059 = sld [smem:[#allocation3 + $0x2f]]
        %v1060 = vstv %s1059
        %v1061 = vmul.f32 %v1060, %v339
        %1063 = vrot.lane.b32.xlu0 %v1061, 32
        %v1064 = vpop.permute.xlu0 %1063
        %v1065 = vrot.slane %v1064, 7
        %v1066 = vsel %vm368, %v1065, %v1064
        %v1068 = vadd.f32 %v1058, %v1066
        %s1069 = sld [smem:[#allocation3 + $0x36]]
        %v1070 = vstv %s1069
        %v1071 = vmul.f32 %v1070, %v373
        %v1072 = vadd.f32 %v1068, %v1071
        %s1073 = sld [smem:[#allocation3 + $0x3d]]
        %v1074 = vstv %s1073
        %v1075 = vmul.f32 %v1074, %v373
        %1077 = vrot.lane.b32.xlu0 %v1075, 112
        %v1078 = vpop.permute.xlu0 %1077
        %v1079 = vrot.slane %v1078, 1
        %v1080 = vsel %vm312, %v1078, %v1079
        %v1082 = vadd.f32 %v1072, %v1080
        %s1083 = sld [smem:[#allocation3 + $0x44]]
        %v1084 = vstv %s1083
        %v1085 = vmul.f32 %v1084, %v373
        %1087 = vrot.lane.b32.xlu0 %v1085, 96
        %v1088 = vpop.permute.xlu0 %1087
        %v1089 = vrot.slane %v1088, 1
        %v1090 = vsel %vm323, %v1088, %v1089
        %v1092 = vadd.f32 %v1082, %v1090
        %s1093 = sld [smem:[#allocation3 + $0x4b]]
        %v1094 = vstv %s1093
        %v1095 = vmul.f32 %v1094, %v408
        %1097 = vrot.lane.b32.xlu0 %v1095, 80
        %v1098 = vpop.permute.xlu0 %1097
        %v1099 = vrot.slane %v1098, 7
        %v1100 = vsel %vm334, %v1099, %v1098
        %v1102 = vadd.f32 %v1092, %v1100
        %s1103 = sld [smem:[#allocation3 + $0x52]]
        %v1104 = vstv %s1103
        %v1105 = vmul.f32 %v1104, %v408
        %1107 = vrot.lane.b32.xlu0 %v1105, 64
        %v1108 = vpop.permute.xlu0 %1107
        %v1109 = vrot.slane %v1108, 7
        %v1110 = vsel %vm346, %v1109, %v1108
        %v1112 = vadd.f32 %v1102, %v1110
        %s1113 = sld [smem:[#allocation3 + $0x59]]
        %v1114 = vstv %s1113
        %v1115 = vmul.f32 %v1114, %v408
        %1117 = vrot.lane.b32.xlu0 %v1115, 48
        %v1118 = vpop.permute.xlu0 %1117
        %v1119 = vrot.slane %v1118, 7
        %v1120 = vsel %vm357, %v1119, %v1118
        %v1122 = vadd.f32 %v1112, %v1120
        %s1123 = sld [smem:[#allocation3 + $0x60]]
        %v1124 = vstv %s1123
        %v1125 = vmul.f32 %v1124, %v408
        %1127 = vrot.lane.b32.xlu0 %v1125, 32
        %v1128 = vpop.permute.xlu0 %1127
        %v1129 = vrot.slane %v1128, 7
        %v1130 = vsel %vm368, %v1129, %v1128
        %v1132 = vadd.f32 %v1122, %v1130
        %s1133 = scalar_lea.vmem [#allocation7], 5
        %v1134 = vld [vmem:[%s1133] ss:$8 sm:$0x3]
        %1136 = vrot.lane.b32.xlu0 %v1132, 46
        %v1137 = vpop.permute.xlu0 %1136
        %v1138 = vrot.slane %v1137, 1
        %vm1139 = vcmask 375808
        %v1140 = vsel %vm1139, %v1137, %v1138
        %v1142 = vmul.f32 %v1134, %v1140
        %v1143 = vadd.f32 %v1004, %v1142
        %s1144 = sld [smem:[#allocation3 + $0x6]]
        %v1145 = vstv %s1144
        %v1146 = vmul.f32 %v1145, %v301
        %v1147 = vadd.f32 %v1146, 0.0
        %s1148 = sld [smem:[#allocation3 + $0xd]]
        %v1149 = vstv %s1148
        %v1150 = vmul.f32 %v1149, %v301
        %1152 = vrot.lane.b32.xlu0 %v1150, 112
        %v1153 = vpop.permute.xlu0 %1152
        %v1154 = vrot.slane %v1153, 1
        %v1155 = vsel %vm312, %v1153, %v1154
        %v1157 = vadd.f32 %v1147, %v1155
        %s1158 = sld [smem:[#allocation3 + $0x14]]
        %v1159 = vstv %s1158
        %v1160 = vmul.f32 %v1159, %v301
        %1162 = vrot.lane.b32.xlu0 %v1160, 96
        %v1163 = vpop.permute.xlu0 %1162
        %v1164 = vrot.slane %v1163, 1
        %v1165 = vsel %vm323, %v1163, %v1164
        %v1167 = vadd.f32 %v1157, %v1165
        %s1168 = sld [smem:[#allocation3 + $0x1b]]
        %v1169 = vstv %s1168
        %v1170 = vmul.f32 %v1169, %v339
        %1172 = vrot.lane.b32.xlu0 %v1170, 80
        %v1173 = vpop.permute.xlu0 %1172
        %v1174 = vrot.slane %v1173, 7
        %v1175 = vsel %vm334, %v1174, %v1173
        %v1177 = vadd.f32 %v1167, %v1175
        %s1178 = sld [smem:[#allocation3 + $0x22]]
        %v1179 = vstv %s1178
        %v1180 = vmul.f32 %v1179, %v339
        %1182 = vrot.lane.b32.xlu0 %v1180, 64
        %v1183 = vpop.permute.xlu0 %1182
        %v1184 = vrot.slane %v1183, 7
        %v1185 = vsel %vm346, %v1184, %v1183
        %v1187 = vadd.f32 %v1177, %v1185
        %s1188 = sld [smem:[#allocation3 + $0x29]]
        %v1189 = vstv %s1188
        %v1190 = vmul.f32 %v1189, %v339
        %1192 = vrot.lane.b32.xlu0 %v1190, 48
        %v1193 = vpop.permute.xlu0 %1192
        %v1194 = vrot.slane %v1193, 7
        %v1195 = vsel %vm357, %v1194, %v1193
        %v1197 = vadd.f32 %v1187, %v1195
        %s1198 = sld [smem:[#allocation3 + $0x30]]
        %v1199 = vstv %s1198
        %v1200 = vmul.f32 %v1199, %v339
        %1202 = vrot.lane.b32.xlu0 %v1200, 32
        %v1203 = vpop.permute.xlu0 %1202
        %v1204 = vrot.slane %v1203, 7
        %v1205 = vsel %vm368, %v1204, %v1203
        %v1207 = vadd.f32 %v1197, %v1205
        %s1208 = sld [smem:[#allocation3 + $0x37]]
        %v1209 = vstv %s1208
        %v1210 = vmul.f32 %v1209, %v373
        %v1211 = vadd.f32 %v1207, %v1210
        %s1212 = sld [smem:[#allocation3 + $0x3e]]
        %v1213 = vstv %s1212
        %v1214 = vmul.f32 %v1213, %v373
        %1216 = vrot.lane.b32.xlu0 %v1214, 112
        %v1217 = vpop.permute.xlu0 %1216
        %v1218 = vrot.slane %v1217, 1
        %v1219 = vsel %vm312, %v1217, %v1218
        %v1221 = vadd.f32 %v1211, %v1219
        %s1222 = sld [smem:[#allocation3 + $0x45]]
        %v1223 = vstv %s1222
        %v1224 = vmul.f32 %v1223, %v373
        %1226 = vrot.lane.b32.xlu0 %v1224, 96
        %v1227 = vpop.permute.xlu0 %1226
        %v1228 = vrot.slane %v1227, 1
        %v1229 = vsel %vm323, %v1227, %v1228
        %v1231 = vadd.f32 %v1221, %v1229
        %s1232 = sld [smem:[#allocation3 + $0x4c]]
        %v1233 = vstv %s1232
        %v1234 = vmul.f32 %v1233, %v408
        %1236 = vrot.lane.b32.xlu0 %v1234, 80
        %v1237 = vpop.permute.xlu0 %1236
        %v1238 = vrot.slane %v1237, 7
        %v1239 = vsel %vm334, %v1238, %v1237
        %v1241 = vadd.f32 %v1231, %v1239
        %s1242 = sld [smem:[#allocation3 + $0x53]]
        %v1243 = vstv %s1242
        %v1244 = vmul.f32 %v1243, %v408
        %1246 = vrot.lane.b32.xlu0 %v1244, 64
        %v1247 = vpop.permute.xlu0 %1246
        %v1248 = vrot.slane %v1247, 7
        %v1249 = vsel %vm346, %v1248, %v1247
        %v1251 = vadd.f32 %v1241, %v1249
        %s1252 = sld [smem:[#allocation3 + $0x5a]]
        %v1253 = vstv %s1252
        %v1254 = vmul.f32 %v1253, %v408
        %1256 = vrot.lane.b32.xlu0 %v1254, 48
        %v1257 = vpop.permute.xlu0 %1256
        %v1258 = vrot.slane %v1257, 7
        %v1259 = vsel %vm357, %v1258, %v1257
        %v1261 = vadd.f32 %v1251, %v1259
        %s1262 = sld [smem:[#allocation3 + $0x61]]
        %v1263 = vstv %s1262
        %v1264 = vmul.f32 %v1263, %v408
        %1266 = vrot.lane.b32.xlu0 %v1264, 32
        %v1267 = vpop.permute.xlu0 %1266
        %v1268 = vrot.slane %v1267, 7
        %v1269 = vsel %vm368, %v1268, %v1267
        %v1271 = vadd.f32 %v1261, %v1269
        %s1272 = scalar_lea.vmem [#allocation7], 6
        %v1273 = vld [vmem:[%s1272] ss:$8 sm:$0x3]
        %1275 = vrot.lane.b32.xlu0 %v1271, 45
        %v1276 = vpop.permute.xlu0 %1275
        %v1277 = vrot.slane %v1276, 1
        %vm1278 = vcmask 367616
        %v1279 = vsel %vm1278, %v1276, %v1277
        %v1281 = vmul.f32 %v1273, %v1279
        %v1282 = vadd.f32 %v1143, %v1281
        %v1283 = vxor.u32 %v1282, 2147483648
        %v1284 = vmul.f32 %v1283, 1.442695
        %v1285 = vpow.pop %v1284
        %v1286 = vadd.f32 %v1285, 1.0
        %v1287 = vrcp.pop %v1286
        %v1288 = vmul.f32 %v1286, %v1287
        %v1289 = vsub.f32 1.0, %v1288
        %v1290 = vmul.f32 %v1287, %v1289
        %v1291 = vadd.f32 %v1287, %v1290
        %vm1292 = vweird.f32 %v1286
        %vm1293 = vweird.f32 %v1287
        %vm1294 = vmor %vm1292, %vm1293
        %v1295 = vsel %vm1294, %v1287, %v1291
        %v1296 = vand.u32 2147483647, %v1286
        %vm1297 = vcmp.eq.f32.partialorder %v1296, 8.507059e+37
        %v1298 = vand.u32 %v1286, 2147483648
        %v1299 = vor.u32 1.1754944e-38, %v1298
        %v1300 = vsel %vm1297, %v1299, %v1295
        %v1301 = vmul.f32 1.0, %v1300
        %1302 = vst.msk [vmem:[%s219] sm:$0x3] %vm279, %v1301
        %s1303 = sand.u32 %s98, 1
        %s1304 = scalar_lea.sflag [#allocation5], %s1303
        %s1305 = sand.u32 %s98, 1
        %s1306 = smul.addr %s1305, 2
        %s1307 = scalar_lea.vmem [#allocation10], %s1306
        // Predicated region
        $region45: #{tpu_custom_call.1} parent=31 // pred_check
          %p1308 = pneg %p108
        $region46: #{tpu_custom_call.1} parent=31 // pred_check_branch
          %1310 = sbr.rel (%p1308) target = $region48
        $region47: #{tpu_custom_call.1} parent=31 // pred_region
          %1312 = vsyncadd %s1304, 0
          %s1313 = smul.addr %s22, 2
          %s1314 = scalar_lea.hbm %s3, %s1313
          %s1316 = sshll.u32 %s1307, 4
          %s1317 = int_to_ptr.vmem [resolvable:$true] %s1316
          %s1318 = sshll.u32 %s1314, 4
          %s1319 = int_to_ptr.hbm [resolvable:$true] %s1318
          %1321 = dma.vmem_to_hbm [thread:$0]  %s1317, 32, %s1319, %s1304
        $region48: #{tpu_custom_call.1} parent=31 // pred_fallthru
          _
      $region32: #{tpu_custom_call.1} parent=5 // pred_fallthru
        _
      %p1322 = scmp.le.s32.totalorder 2, %s17
      // Predicated region
      $region49: #{tpu_custom_call.1} parent=5 // pred_check
        %p1323 = pneg %p1322
      $region50: #{tpu_custom_call.1} parent=5 // pred_check_branch
        %1325 = sbr.rel (%p1323) target = $region52
      $region51: #{tpu_custom_call.1} parent=5 // pred_region
        %s1326 = ssub.s32 %s17, 2
        // Predicated region
        $region53: #{tpu_custom_call.1} parent=51 // pred_check
          %p1327 = pneg %p114
        $region54: #{tpu_custom_call.1} parent=51 // pred_check_branch
          %1329 = sbr.rel (%p1327) target = $region56
        $region55: #{tpu_custom_call.1} parent=51 // pred_region
          %s1330 = sand.u32 %s99, 1
          %s1331 = scalar_lea.sflag [#allocation5], %s1330
          %s1332 = sand.u32 %s99, 1
          %s1333 = smul.addr %s1332, 2
          %s1334 = scalar_lea.vmem [#allocation10], %s1333
          %1336 = dma.done %s1331, 32
        $region56: #{tpu_custom_call.1} parent=51 // pred_fallthru
          _
      $region52: #{tpu_custom_call.1} parent=5 // pred_fallthru
        _
    $region6: #{tpu_custom_call.1} parent=1 // loop_footer
      %s21 = sadd.s32 1, %s17
    $region7: #{tpu_custom_call.1} parent=1 // loop_footer_branch
      %16 = sbr.rel target = $region3
    $region8: #{tpu_custom_call.1} parent=1 // loop_exit
      _
    %1337 = vsyncpa [#allocation4], 1
    %s1338 = scalar_lea.sflag [#allocation4], 1
    %1339 = vsyncpa %s1338, 1
    %1340 = vsyncpa [#allocation9], 1
    %s1341 = scalar_lea.sflag [#allocation9], 1
    %1342 = vsyncpa %s1341, 1
    %1343 = vsyncpa [#allocation5], 1
    %s1344 = scalar_lea.sflag [#allocation5], 1
    %1345 = vsyncpa %s1344, 1
    %1346 = vsyncpa [#allocation6], 1
    %s1347 = scalar_lea.sflag [#allocation6], 1
    %1348 = vsyncpa %s1347, 1

</llo_original>
